<compile_context>
chip_gen: v7x
topology: tpu7x:2x2x1
jax: 0.10.0
libtpu: 0.0.40
codegen_flags: <defaults>
</compile_context>

<pallas_src>
import functools

import jax
import jax.numpy as jnp
from jax import lax
from jax.experimental import pallas as pl
from jax.experimental.pallas import tpu as pltpu


def _rk4_ode_kernel(x_ref, wt_ref, b_ref, o_ref, *, num_steps: int,
                    channels: int):
    """Integrate y' = tanh(W^T y + b) from t=0..1 with RK4 on a (C, T) tile."""
    y0 = x_ref[...].astype(jnp.float32)        # (C, T)   pixels on lanes
    wt = wt_ref[...].astype(jnp.float32)       # (C, C)   == W^T
    b = b_ref[...].astype(jnp.float32)         # (C, 1)

    tile_cols = y0.shape[1]
    # Hoist the bias broadcast out of the RK loop (32 uses per tile otherwise).
    b_full = jnp.broadcast_to(b, (channels, tile_cols))

    if channels <= 8:
        # Tiny channel mix: C broadcast-FMAs on dense vregs (VPU); a
        # (C<=8)-wide matmul would leave >96% of the MXU idle and still pay
        # the MXU push/pop latency 4x per RK step.
        def mix(y):
            z = b_full
            for k in range(channels):
                z = z + wt[:, k:k + 1] * y[k:k + 1, :]
            return z
    else:
        def mix(y):
            return jnp.dot(wt, y, preferred_element_type=jnp.float32) + b_full

    def f(y):
        return jnp.tanh(mix(y))

    dt = 1.0 / float(num_steps)

    def step(_, y):
        k1 = f(y)
        k2 = f(y + (0.5 * dt) * k1)
        k3 = f(y + (0.5 * dt) * k2)
        k4 = f(y + dt * k3)
        return y + (dt / 6.0) * (k1 + 2.0 * k2 + 2.0 * k3 + k4)

    # Unrolled: small static trip count; gives the LLO scheduler visibility
    # to interleave VPU adds / EUP tanh across RK stages.
    y1 = lax.fori_loop(0, num_steps, step, y0, unroll=True)
    o_ref[...] = y1.astype(o_ref.dtype)


def _pick_tile_cols(rows: int, max_tile: int = 2048) -> int:
    """Lane tile: multiple of 128, as large as possible (>= ~0.35us/step
    pipeline overhead amortization) while keeping grid >= 2 when possible
    (v7x has 2 TensorCores sharded over the parallel grid axis)."""
    padded = pl.cdiv(rows, 128) * 128
    half = (padded // 2) // 128 * 128
    return max(128, min(max_tile, half))


def ode_block_forward(x_nchw, w, b, *, tol=1e-3, adjoint=False,
                      num_steps=8, max_tile_cols=2048):
    """Pallas implementation of ODEBlock.forward.

    x_nchw: (N, C, H, W) float32 (PyTorch NCHW convention at the boundary).
    w:      (C, C) 1x1-conv weight of the synthetic odefunc (acts as y @ w).
    b:      (1, C) bias of the synthetic odefunc.
    Returns out[1][:N//2]  ==  state at t=1 for the first half of the batch.
    """
    del tol, adjoint  # fixed-step forward integrator; see TODO(synk) above.
    N, C, H, W = x_nchw.shape
    half = N // 2

    # Only the first half of the batch is returned and rows (pixels) are
    # independent under a pointwise odefunc -> slice BEFORE integrating.
    x_half = x_nchw[:half]
    rows = half * H * W

    # Lane-dense layout: (N/2, C, H, W) -> (C, N/2, H, W) -> (C, rows).
    x_cols = jnp.transpose(x_half, (1, 0, 2, 3)).reshape(C, rows)

    tile = _pick_tile_cols(rows, max_tile_cols)
    padded = pl.cdiv(rows, tile) * tile
    if padded != rows:
        # Zero-padding is harmless: extra columns integrate independently
        # and are sliced off afterwards.
        x_cols = jnp.pad(x_cols, ((0, 0), (0, padded - rows)))

    wt = jnp.transpose(w)              # (y @ W)^T == W^T @ y^T
    b_col = jnp.reshape(b, (C, 1))

    kernel = functools.partial(_rk4_ode_kernel, num_steps=num_steps,
                               channels=C)

    out_cols = pl.pallas_call(
        kernel,
        out_shape=jax.ShapeDtypeStruct((C, padded), x_cols.dtype),
        grid_spec=pltpu.PrefetchScalarGridSpec(
            num_scalar_prefetch=0,
            grid=(padded // tile,),
            in_specs=[
                pl.BlockSpec((C, tile), lambda i: (0, i)),   # state tile
                pl.BlockSpec((C, C), lambda i: (0, 0)),      # W^T (full, tiny)
                pl.BlockSpec((C, 1), lambda i: (0, 0)),      # bias (full, tiny)
            ],
            out_specs=pl.BlockSpec((C, tile), lambda i: (0, i)),
        ),
        compiler_params=pltpu.CompilerParams(
            dimension_semantics=("parallel",),
        ),
    )(x_cols, wt, b_col)

    out_cols = out_cols[:, :rows]
    out_nchw = jnp.transpose(out_cols.reshape(C, half, H, W), (1, 0, 2, 3))
    return out_nchw


def _reference_forward(x_nchw, w, b, num_steps=8):
    """Pure-JAX reference of the same fixed-step RK4 integration."""
    N, C, H, W = x_nchw.shape
    y = jnp.transpose(x_nchw, (0, 2, 3, 1)).reshape(N * H * W, C)

    def f(y_):
        return jnp.tanh(y_ @ w + b)

    dt = 1.0 / num_steps
    for _ in range(num_steps):
        k1 = f(y)
        k2 = f(y + 0.5 * dt * k1)
        k3 = f(y + 0.5 * dt * k2)
        k4 = f(y + dt * k3)
        y = y + (dt / 6.0) * (k1 + 2 * k2 + 2 * k3 + k4)
    out = jnp.transpose(y.reshape(N, H, W, C), (0, 3, 1, 2))
    return out[: N // 2]


if __name__ == "__main__":
    key = jax.random.PRNGKey(0)
    kx, kw, kb = jax.random.split(key, 3)

    N, C, H, W = 2, 4, 16, 16
    x = jax.random.normal(kx, (N, C, H, W), dtype=jnp.float32)
    # Deterministic synthetic odefunc parameters (1x1 conv: C -> C).
    w = jax.random.normal(kw, (C, C), dtype=jnp.float32) * 0.1
    b = jax.random.normal(kb, (1, C), dtype=jnp.float32) * 0.1

    out = ode_block_forward(x, w, b, tol=1e-3, adjoint=False, num_steps=8)
    out = jax.block_until_ready(out)

    ref = _reference_forward(x, w, b, num_steps=8)
    assert out.shape == (N // 2, C, H, W), out.shape
    assert jnp.allclose(out, ref, atol=1e-5, rtol=1e-5), "mismatch vs reference"

    print("KERNEL_OK")
</pallas_src>

<mosaic_0001>
module attributes {stable_mosaic.version = 11 : i64} {
  func.func @_rk4_ode_kernel(%arg0: i32, %arg1: memref<4x128xf32, #tpu.memory_space<vmem>>, %arg2: memref<4x4xf32, #tpu.memory_space<vmem>>, %arg3: memref<4x1xf32, #tpu.memory_space<vmem>>, %arg4: memref<4x128xf32, #tpu.memory_space<vmem>>) attributes {dimension_semantics = [#tpu.dimension_semantics<parallel>], iteration_bounds = array<i64: 2>, scalar_prefetch = 0 : i64, scratch_operands = 0 : i64, tpu.core_type = #tpu.core_type<tc>, window_params = [{transform_indices = @transform_0, window_bounds = array<i64: 4, 128>}, {pipeline_mode = #tpu.pipeline_mode<synchronous>, transform_indices = @transform_1, window_bounds = array<i64: 4, 4>}, {pipeline_mode = #tpu.pipeline_mode<synchronous>, transform_indices = @transform_2, window_bounds = array<i64: 4, 1>}, {transform_indices = @transform_3, window_bounds = array<i64: 4, 128>}]} {
    %c0 = arith.constant 0 : index
    %c0_0 = arith.constant 0 : index
    %0 = vector.load %arg1[%c0, %c0_0] : memref<4x128xf32, #tpu.memory_space<vmem>>, vector<4x128xf32>
    %c0_1 = arith.constant 0 : index
    %c0_2 = arith.constant 0 : index
    %1 = vector.load %arg2[%c0_1, %c0_2] : memref<4x4xf32, #tpu.memory_space<vmem>>, vector<4x4xf32>
    %c0_3 = arith.constant 0 : index
    %c0_4 = arith.constant 0 : index
    %2 = vector.load %arg3[%c0_3, %c0_4] : memref<4x1xf32, #tpu.memory_space<vmem>>, vector<4x1xf32>
    %3 = vector.shape_cast %2 : vector<4x1xf32> to vector<4x1xf32>
    %4 = vector.broadcast %3 : vector<4x1xf32> to vector<4x128xf32>
    %c0_i32 = arith.constant 0 : i32
    %5 = vector.extract_strided_slice %1 {offsets = [0, 0], sizes = [4, 1], strides = [1, 1]} : vector<4x4xf32> to vector<4x1xf32>
    %6 = vector.extract_strided_slice %0 {offsets = [0, 0], sizes = [1, 128], strides = [1, 1]} : vector<4x128xf32> to vector<1x128xf32>
    %7 = vector.broadcast %5 : vector<4x1xf32> to vector<4x128xf32>
    %8 = vector.broadcast %6 : vector<1x128xf32> to vector<4x128xf32>
    %9 = arith.mulf %7, %8 : vector<4x128xf32>
    %10 = arith.addf %4, %9 : vector<4x128xf32>
    %11 = vector.extract_strided_slice %1 {offsets = [0, 1], sizes = [4, 1], strides = [1, 1]} : vector<4x4xf32> to vector<4x1xf32>
    %12 = vector.extract_strided_slice %0 {offsets = [1, 0], sizes = [1, 128], strides = [1, 1]} : vector<4x128xf32> to vector<1x128xf32>
    %13 = vector.broadcast %11 : vector<4x1xf32> to vector<4x128xf32>
    %14 = vector.broadcast %12 : vector<1x128xf32> to vector<4x128xf32>
    %15 = arith.mulf %13, %14 : vector<4x128xf32>
    %16 = arith.addf %10, %15 : vector<4x128xf32>
    %17 = vector.extract_strided_slice %1 {offsets = [0, 2], sizes = [4, 1], strides = [1, 1]} : vector<4x4xf32> to vector<4x1xf32>
    %18 = vector.extract_strided_slice %0 {offsets = [2, 0], sizes = [1, 128], strides = [1, 1]} : vector<4x128xf32> to vector<1x128xf32>
    %19 = vector.broadcast %17 : vector<4x1xf32> to vector<4x128xf32>
    %20 = vector.broadcast %18 : vector<1x128xf32> to vector<4x128xf32>
    %21 = arith.mulf %19, %20 : vector<4x128xf32>
    %22 = arith.addf %16, %21 : vector<4x128xf32>
    %23 = vector.extract_strided_slice %1 {offsets = [0, 3], sizes = [4, 1], strides = [1, 1]} : vector<4x4xf32> to vector<4x1xf32>
    %24 = vector.extract_strided_slice %0 {offsets = [3, 0], sizes = [1, 128], strides = [1, 1]} : vector<4x128xf32> to vector<1x128xf32>
    %25 = vector.broadcast %23 : vector<4x1xf32> to vector<4x128xf32>
    %26 = vector.broadcast %24 : vector<1x128xf32> to vector<4x128xf32>
    %27 = arith.mulf %25, %26 : vector<4x128xf32>
    %28 = arith.addf %22, %27 : vector<4x128xf32>
    %29 = math.tanh %28 : vector<4x128xf32>
    %cst = arith.constant 6.250000e-02 : f32
    %30 = vector.broadcast %cst : f32 to vector<4x128xf32>
    %31 = arith.mulf %30, %29 : vector<4x128xf32>
    %32 = arith.addf %0, %31 : vector<4x128xf32>
    %33 = vector.extract_strided_slice %1 {offsets = [0, 0], sizes = [4, 1], strides = [1, 1]} : vector<4x4xf32> to vector<4x1xf32>
    %34 = vector.extract_strided_slice %32 {offsets = [0, 0], sizes = [1, 128], strides = [1, 1]} : vector<4x128xf32> to vector<1x128xf32>
    %35 = vector.broadcast %33 : vector<4x1xf32> to vector<4x128xf32>
    %36 = vector.broadcast %34 : vector<1x128xf32> to vector<4x128xf32>
    %37 = arith.mulf %35, %36 : vector<4x128xf32>
    %38 = arith.addf %4, %37 : vector<4x128xf32>
    %39 = vector.extract_strided_slice %1 {offsets = [0, 1], sizes = [4, 1], strides = [1, 1]} : vector<4x4xf32> to vector<4x1xf32>
    %40 = vector.extract_strided_slice %32 {offsets = [1, 0], sizes = [1, 128], strides = [1, 1]} : vector<4x128xf32> to vector<1x128xf32>
    %41 = vector.broadcast %39 : vector<4x1xf32> to vector<4x128xf32>
    %42 = vector.broadcast %40 : vector<1x128xf32> to vector<4x128xf32>
    %43 = arith.mulf %41, %42 : vector<4x128xf32>
    %44 = arith.addf %38, %43 : vector<4x128xf32>
    %45 = vector.extract_strided_slice %1 {offsets = [0, 2], sizes = [4, 1], strides = [1, 1]} : vector<4x4xf32> to vector<4x1xf32>
    %46 = vector.extract_strided_slice %32 {offsets = [2, 0], sizes = [1, 128], strides = [1, 1]} : vector<4x128xf32> to vector<1x128xf32>
    %47 = vector.broadcast %45 : vector<4x1xf32> to vector<4x128xf32>
    %48 = vector.broadcast %46 : vector<1x128xf32> to vector<4x128xf32>
    %49 = arith.mulf %47, %48 : vector<4x128xf32>
    %50 = arith.addf %44, %49 : vector<4x128xf32>
    %51 = vector.extract_strided_slice %1 {offsets = [0, 3], sizes = [4, 1], strides = [1, 1]} : vector<4x4xf32> to vector<4x1xf32>
    %52 = vector.extract_strided_slice %32 {offsets = [3, 0], sizes = [1, 128], strides = [1, 1]} : vector<4x128xf32> to vector<1x128xf32>
    %53 = vector.broadcast %51 : vector<4x1xf32> to vector<4x128xf32>
    %54 = vector.broadcast %52 : vector<1x128xf32> to vector<4x128xf32>
    %55 = arith.mulf %53, %54 : vector<4x128xf32>
    %56 = arith.addf %50, %55 : vector<4x128xf32>
    %57 = math.tanh %56 : vector<4x128xf32>
    %cst_5 = arith.constant 6.250000e-02 : f32
    %58 = vector.broadcast %cst_5 : f32 to vector<4x128xf32>
    %59 = arith.mulf %58, %57 : vector<4x128xf32>
    %60 = arith.addf %0, %59 : vector<4x128xf32>
    %61 = vector.extract_strided_slice %1 {offsets = [0, 0], sizes = [4, 1], strides = [1, 1]} : vector<4x4xf32> to vector<4x1xf32>
    %62 = vector.extract_strided_slice %60 {offsets = [0, 0], sizes = [1, 128], strides = [1, 1]} : vector<4x128xf32> to vector<1x128xf32>
    %63 = vector.broadcast %61 : vector<4x1xf32> to vector<4x128xf32>
    %64 = vector.broadcast %62 : vector<1x128xf32> to vector<4x128xf32>
    %65 = arith.mulf %63, %64 : vector<4x128xf32>
    %66 = arith.addf %4, %65 : vector<4x128xf32>
    %67 = vector.extract_strided_slice %1 {offsets = [0, 1], sizes = [4, 1], strides = [1, 1]} : vector<4x4xf32> to vector<4x1xf32>
    %68 = vector.extract_strided_slice %60 {offsets = [1, 0], sizes = [1, 128], strides = [1, 1]} : vector<4x128xf32> to vector<1x128xf32>
    %69 = vector.broadcast %67 : vector<4x1xf32> to vector<4x128xf32>
    %70 = vector.broadcast %68 : vector<1x128xf32> to vector<4x128xf32>
    %71 = arith.mulf %69, %70 : vector<4x128xf32>
    %72 = arith.addf %66, %71 : vector<4x128xf32>
    %73 = vector.extract_strided_slice %1 {offsets = [0, 2], sizes = [4, 1], strides = [1, 1]} : vector<4x4xf32> to vector<4x1xf32>
    %74 = vector.extract_strided_slice %60 {offsets = [2, 0], sizes = [1, 128], strides = [1, 1]} : vector<4x128xf32> to vector<1x128xf32>
    %75 = vector.broadcast %73 : vector<4x1xf32> to vector<4x128xf32>
    %76 = vector.broadcast %74 : vector<1x128xf32> to vector<4x128xf32>
    %77 = arith.mulf %75, %76 : vector<4x128xf32>
    %78 = arith.addf %72, %77 : vector<4x128xf32>
    %79 = vector.extract_strided_slice %1 {offsets = [0, 3], sizes = [4, 1], strides = [1, 1]} : vector<4x4xf32> to vector<4x1xf32>
    %80 = vector.extract_strided_slice %60 {offsets = [3, 0], sizes = [1, 128], strides = [1, 1]} : vector<4x128xf32> to vector<1x128xf32>
    %81 = vector.broadcast %79 : vector<4x1xf32> to vector<4x128xf32>
    %82 = vector.broadcast %80 : vector<1x128xf32> to vector<4x128xf32>
    %83 = arith.mulf %81, %82 : vector<4x128xf32>
    %84 = arith.addf %78, %83 : vector<4x128xf32>
    %85 = math.tanh %84 : vector<4x128xf32>
    %cst_6 = arith.constant 1.250000e-01 : f32
    %86 = vector.broadcast %cst_6 : f32 to vector<4x128xf32>
    %87 = arith.mulf %86, %85 : vector<4x128xf32>
    %88 = arith.addf %0, %87 : vector<4x128xf32>
    %89 = vector.extract_strided_slice %1 {offsets = [0, 0], sizes = [4, 1], strides = [1, 1]} : vector<4x4xf32> to vector<4x1xf32>
    %90 = vector.extract_strided_slice %88 {offsets = [0, 0], sizes = [1, 128], strides = [1, 1]} : vector<4x128xf32> to vector<1x128xf32>
    %91 = vector.broadcast %89 : vector<4x1xf32> to vector<4x128xf32>
    %92 = vector.broadcast %90 : vector<1x128xf32> to vector<4x128xf32>
    %93 = arith.mulf %91, %92 : vector<4x128xf32>
    %94 = arith.addf %4, %93 : vector<4x128xf32>
    %95 = vector.extract_strided_slice %1 {offsets = [0, 1], sizes = [4, 1], strides = [1, 1]} : vector<4x4xf32> to vector<4x1xf32>
    %96 = vector.extract_strided_slice %88 {offsets = [1, 0], sizes = [1, 128], strides = [1, 1]} : vector<4x128xf32> to vector<1x128xf32>
    %97 = vector.broadcast %95 : vector<4x1xf32> to vector<4x128xf32>
    %98 = vector.broadcast %96 : vector<1x128xf32> to vector<4x128xf32>
    %99 = arith.mulf %97, %98 : vector<4x128xf32>
    %100 = arith.addf %94, %99 : vector<4x128xf32>
    %101 = vector.extract_strided_slice %1 {offsets = [0, 2], sizes = [4, 1], strides = [1, 1]} : vector<4x4xf32> to vector<4x1xf32>
    %102 = vector.extract_strided_slice %88 {offsets = [2, 0], sizes = [1, 128], strides = [1, 1]} : vector<4x128xf32> to vector<1x128xf32>
    %103 = vector.broadcast %101 : vector<4x1xf32> to vector<4x128xf32>
    %104 = vector.broadcast %102 : vector<1x128xf32> to vector<4x128xf32>
    %105 = arith.mulf %103, %104 : vector<4x128xf32>
    %106 = arith.addf %100, %105 : vector<4x128xf32>
    %107 = vector.extract_strided_slice %1 {offsets = [0, 3], sizes = [4, 1], strides = [1, 1]} : vector<4x4xf32> to vector<4x1xf32>
    %108 = vector.extract_strided_slice %88 {offsets = [3, 0], sizes = [1, 128], strides = [1, 1]} : vector<4x128xf32> to vector<1x128xf32>
    %109 = vector.broadcast %107 : vector<4x1xf32> to vector<4x128xf32>
    %110 = vector.broadcast %108 : vector<1x128xf32> to vector<4x128xf32>
    %111 = arith.mulf %109, %110 : vector<4x128xf32>
    %112 = arith.addf %106, %111 : vector<4x128xf32>
    %113 = math.tanh %112 : vector<4x128xf32>
    %cst_7 = arith.constant 2.000000e+00 : f32
    %114 = vector.broadcast %cst_7 : f32 to vector<4x128xf32>
    %115 = arith.mulf %114, %57 : vector<4x128xf32>
    %116 = arith.addf %29, %115 : vector<4x128xf32>
    %cst_8 = arith.constant 2.000000e+00 : f32
    %117 = vector.broadcast %cst_8 : f32 to vector<4x128xf32>
    %118 = arith.mulf %117, %85 : vector<4x128xf32>
    %119 = arith.addf %116, %118 : vector<4x128xf32>
    %120 = arith.addf %119, %113 : vector<4x128xf32>
    %cst_9 = arith.constant 0.020833334 : f32
    %121 = vector.broadcast %cst_9 : f32 to vector<4x128xf32>
    %122 = arith.mulf %121, %120 : vector<4x128xf32>
    %123 = arith.addf %0, %122 : vector<4x128xf32>
    %c1_i32 = arith.constant 1 : i32
    %124 = vector.extract_strided_slice %1 {offsets = [0, 0], sizes = [4, 1], strides = [1, 1]} : vector<4x4xf32> to vector<4x1xf32>
    %125 = vector.extract_strided_slice %123 {offsets = [0, 0], sizes = [1, 128], strides = [1, 1]} : vector<4x128xf32> to vector<1x128xf32>
    %126 = vector.broadcast %124 : vector<4x1xf32> to vector<4x128xf32>
    %127 = vector.broadcast %125 : vector<1x128xf32> to vector<4x128xf32>
    %128 = arith.mulf %126, %127 : vector<4x128xf32>
    %129 = arith.addf %4, %128 : vector<4x128xf32>
    %130 = vector.extract_strided_slice %1 {offsets = [0, 1], sizes = [4, 1], strides = [1, 1]} : vector<4x4xf32> to vector<4x1xf32>
    %131 = vector.extract_strided_slice %123 {offsets = [1, 0], sizes = [1, 128], strides = [1, 1]} : vector<4x128xf32> to vector<1x128xf32>
    %132 = vector.broadcast %130 : vector<4x1xf32> to vector<4x128xf32>
    %133 = vector.broadcast %131 : vector<1x128xf32> to vector<4x128xf32>
    %134 = arith.mulf %132, %133 : vector<4x128xf32>
    %135 = arith.addf %129, %134 : vector<4x128xf32>
    %136 = vector.extract_strided_slice %1 {offsets = [0, 2], sizes = [4, 1], strides = [1, 1]} : vector<4x4xf32> to vector<4x1xf32>
    %137 = vector.extract_strided_slice %123 {offsets = [2, 0], sizes = [1, 128], strides = [1, 1]} : vector<4x128xf32> to vector<1x128xf32>
    %138 = vector.broadcast %136 : vector<4x1xf32> to vector<4x128xf32>
    %139 = vector.broadcast %137 : vector<1x128xf32> to vector<4x128xf32>
    %140 = arith.mulf %138, %139 : vector<4x128xf32>
    %141 = arith.addf %135, %140 : vector<4x128xf32>
    %142 = vector.extract_strided_slice %1 {offsets = [0, 3], sizes = [4, 1], strides = [1, 1]} : vector<4x4xf32> to vector<4x1xf32>
    %143 = vector.extract_strided_slice %123 {offsets = [3, 0], sizes = [1, 128], strides = [1, 1]} : vector<4x128xf32> to vector<1x128xf32>
    %144 = vector.broadcast %142 : vector<4x1xf32> to vector<4x128xf32>
    %145 = vector.broadcast %143 : vector<1x128xf32> to vector<4x128xf32>
    %146 = arith.mulf %144, %145 : vector<4x128xf32>
    %147 = arith.addf %141, %146 : vector<4x128xf32>
    %148 = math.tanh %147 : vector<4x128xf32>
    %cst_10 = arith.constant 6.250000e-02 : f32
    %149 = vector.broadcast %cst_10 : f32 to vector<4x128xf32>
    %150 = arith.mulf %149, %148 : vector<4x128xf32>
    %151 = arith.addf %123, %150 : vector<4x128xf32>
    %152 = vector.extract_strided_slice %1 {offsets = [0, 0], sizes = [4, 1], strides = [1, 1]} : vector<4x4xf32> to vector<4x1xf32>
    %153 = vector.extract_strided_slice %151 {offsets = [0, 0], sizes = [1, 128], strides = [1, 1]} : vector<4x128xf32> to vector<1x128xf32>
    %154 = vector.broadcast %152 : vector<4x1xf32> to vector<4x128xf32>
    %155 = vector.broadcast %153 : vector<1x128xf32> to vector<4x128xf32>
    %156 = arith.mulf %154, %155 : vector<4x128xf32>
    %157 = arith.addf %4, %156 : vector<4x128xf32>
    %158 = vector.extract_strided_slice %1 {offsets = [0, 1], sizes = [4, 1], strides = [1, 1]} : vector<4x4xf32> to vector<4x1xf32>
    %159 = vector.extract_strided_slice %151 {offsets = [1, 0], sizes = [1, 128], strides = [1, 1]} : vector<4x128xf32> to vector<1x128xf32>
    %160 = vector.broadcast %158 : vector<4x1xf32> to vector<4x128xf32>
    %161 = vector.broadcast %159 : vector<1x128xf32> to vector<4x128xf32>
    %162 = arith.mulf %160, %161 : vector<4x128xf32>
    %163 = arith.addf %157, %162 : vector<4x128xf32>
    %164 = vector.extract_strided_slice %1 {offsets = [0, 2], sizes = [4, 1], strides = [1, 1]} : vector<4x4xf32> to vector<4x1xf32>
    %165 = vector.extract_strided_slice %151 {offsets = [2, 0], sizes = [1, 128], strides = [1, 1]} : vector<4x128xf32> to vector<1x128xf32>
    %166 = vector.broadcast %164 : vector<4x1xf32> to vector<4x128xf32>
    %167 = vector.broadcast %165 : vector<1x128xf32> to vector<4x128xf32>
    %168 = arith.mulf %166, %167 : vector<4x128xf32>
    %169 = arith.addf %163, %168 : vector<4x128xf32>
    %170 = vector.extract_strided_slice %1 {offsets = [0, 3], sizes = [4, 1], strides = [1, 1]} : vector<4x4xf32> to vector<4x1xf32>
    %171 = vector.extract_strided_slice %151 {offsets = [3, 0], sizes = [1, 128], strides = [1, 1]} : vector<4x128xf32> to vector<1x128xf32>
    %172 = vector.broadcast %170 : vector<4x1xf32> to vector<4x128xf32>
    %173 = vector.broadcast %171 : vector<1x128xf32> to vector<4x128xf32>
    %174 = arith.mulf %172, %173 : vector<4x128xf32>
    %175 = arith.addf %169, %174 : vector<4x128xf32>
    %176 = math.tanh %175 : vector<4x128xf32>
    %cst_11 = arith.constant 6.250000e-02 : f32
    %177 = vector.broadcast %cst_11 : f32 to vector<4x128xf32>
    %178 = arith.mulf %177, %176 : vector<4x128xf32>
    %179 = arith.addf %123, %178 : vector<4x128xf32>
    %180 = vector.extract_strided_slice %1 {offsets = [0, 0], sizes = [4, 1], strides = [1, 1]} : vector<4x4xf32> to vector<4x1xf32>
    %181 = vector.extract_strided_slice %179 {offsets = [0, 0], sizes = [1, 128], strides = [1, 1]} : vector<4x128xf32> to vector<1x128xf32>
    %182 = vector.broadcast %180 : vector<4x1xf32> to vector<4x128xf32>
    %183 = vector.broadcast %181 : vector<1x128xf32> to vector<4x128xf32>
    %184 = arith.mulf %182, %183 : vector<4x128xf32>
    %185 = arith.addf %4, %184 : vector<4x128xf32>
    %186 = vector.extract_strided_slice %1 {offsets = [0, 1], sizes = [4, 1], strides = [1, 1]} : vector<4x4xf32> to vector<4x1xf32>
    %187 = vector.extract_strided_slice %179 {offsets = [1, 0], sizes = [1, 128], strides = [1, 1]} : vector<4x128xf32> to vector<1x128xf32>
    %188 = vector.broadcast %186 : vector<4x1xf32> to vector<4x128xf32>
    %189 = vector.broadcast %187 : vector<1x128xf32> to vector<4x128xf32>
    %190 = arith.mulf %188, %189 : vector<4x128xf32>
    %191 = arith.addf %185, %190 : vector<4x128xf32>
    %192 = vector.extract_strided_slice %1 {offsets = [0, 2], sizes = [4, 1], strides = [1, 1]} : vector<4x4xf32> to vector<4x1xf32>
    %193 = vector.extract_strided_slice %179 {offsets = [2, 0], sizes = [1, 128], strides = [1, 1]} : vector<4x128xf32> to vector<1x128xf32>
    %194 = vector.broadcast %192 : vector<4x1xf32> to vector<4x128xf32>
    %195 = vector.broadcast %193 : vector<1x128xf32> to vector<4x128xf32>
    %196 = arith.mulf %194, %195 : vector<4x128xf32>
    %197 = arith.addf %191, %196 : vector<4x128xf32>
    %198 = vector.extract_strided_slice %1 {offsets = [0, 3], sizes = [4, 1], strides = [1, 1]} : vector<4x4xf32> to vector<4x1xf32>
    %199 = vector.extract_strided_slice %179 {offsets = [3, 0], sizes = [1, 128], strides = [1, 1]} : vector<4x128xf32> to vector<1x128xf32>
    %200 = vector.broadcast %198 : vector<4x1xf32> to vector<4x128xf32>
    %201 = vector.broadcast %199 : vector<1x128xf32> to vector<4x128xf32>
    %202 = arith.mulf %200, %201 : vector<4x128xf32>
    %203 = arith.addf %197, %202 : vector<4x128xf32>
    %204 = math.tanh %203 : vector<4x128xf32>
    %cst_12 = arith.constant 1.250000e-01 : f32
    %205 = vector.broadcast %cst_12 : f32 to vector<4x128xf32>
    %206 = arith.mulf %205, %204 : vector<4x128xf32>
    %207 = arith.addf %123, %206 : vector<4x128xf32>
    %208 = vector.extract_strided_slice %1 {offsets = [0, 0], sizes = [4, 1], strides = [1, 1]} : vector<4x4xf32> to vector<4x1xf32>
    %209 = vector.extract_strided_slice %207 {offsets = [0, 0], sizes = [1, 128], strides = [1, 1]} : vector<4x128xf32> to vector<1x128xf32>
    %210 = vector.broadcast %208 : vector<4x1xf32> to vector<4x128xf32>
    %211 = vector.broadcast %209 : vector<1x128xf32> to vector<4x128xf32>
    %212 = arith.mulf %210, %211 : vector<4x128xf32>
    %213 = arith.addf %4, %212 : vector<4x128xf32>
    %214 = vector.extract_strided_slice %1 {offsets = [0, 1], sizes = [4, 1], strides = [1, 1]} : vector<4x4xf32> to vector<4x1xf32>
    %215 = vector.extract_strided_slice %207 {offsets = [1, 0], sizes = [1, 128], strides = [1, 1]} : vector<4x128xf32> to vector<1x128xf32>
    %216 = vector.broadcast %214 : vector<4x1xf32> to vector<4x128xf32>
    %217 = vector.broadcast %215 : vector<1x128xf32> to vector<4x128xf32>
    %218 = arith.mulf %216, %217 : vector<4x128xf32>
    %219 = arith.addf %213, %218 : vector<4x128xf32>
    %220 = vector.extract_strided_slice %1 {offsets = [0, 2], sizes = [4, 1], strides = [1, 1]} : vector<4x4xf32> to vector<4x1xf32>
    %221 = vector.extract_strided_slice %207 {offsets = [2, 0], sizes = [1, 128], strides = [1, 1]} : vector<4x128xf32> to vector<1x128xf32>
    %222 = vector.broadcast %220 : vector<4x1xf32> to vector<4x128xf32>
    %223 = vector.broadcast %221 : vector<1x128xf32> to vector<4x128xf32>
    %224 = arith.mulf %222, %223 : vector<4x128xf32>
    %225 = arith.addf %219, %224 : vector<4x128xf32>
    %226 = vector.extract_strided_slice %1 {offsets = [0, 3], sizes = [4, 1], strides = [1, 1]} : vector<4x4xf32> to vector<4x1xf32>
    %227 = vector.extract_strided_slice %207 {offsets = [3, 0], sizes = [1, 128], strides = [1, 1]} : vector<4x128xf32> to vector<1x128xf32>
    %228 = vector.broadcast %226 : vector<4x1xf32> to vector<4x128xf32>
    %229 = vector.broadcast %227 : vector<1x128xf32> to vector<4x128xf32>
    %230 = arith.mulf %228, %229 : vector<4x128xf32>
    %231 = arith.addf %225, %230 : vector<4x128xf32>
    %232 = math.tanh %231 : vector<4x128xf32>
    %cst_13 = arith.constant 2.000000e+00 : f32
    %233 = vector.broadcast %cst_13 : f32 to vector<4x128xf32>
    %234 = arith.mulf %233, %176 : vector<4x128xf32>
    %235 = arith.addf %148, %234 : vector<4x128xf32>
    %cst_14 = arith.constant 2.000000e+00 : f32
    %236 = vector.broadcast %cst_14 : f32 to vector<4x128xf32>
    %237 = arith.mulf %236, %204 : vector<4x128xf32>
    %238 = arith.addf %235, %237 : vector<4x128xf32>
    %239 = arith.addf %238, %232 : vector<4x128xf32>
    %cst_15 = arith.constant 0.020833334 : f32
    %240 = vector.broadcast %cst_15 : f32 to vector<4x128xf32>
    %241 = arith.mulf %240, %239 : vector<4x128xf32>
    %242 = arith.addf %123, %241 : vector<4x128xf32>
    %c2_i32 = arith.constant 2 : i32
    %243 = vector.extract_strided_slice %1 {offsets = [0, 0], sizes = [4, 1], strides = [1, 1]} : vector<4x4xf32> to vector<4x1xf32>
    %244 = vector.extract_strided_slice %242 {offsets = [0, 0], sizes = [1, 128], strides = [1, 1]} : vector<4x128xf32> to vector<1x128xf32>
    %245 = vector.broadcast %243 : vector<4x1xf32> to vector<4x128xf32>
    %246 = vector.broadcast %244 : vector<1x128xf32> to vector<4x128xf32>
    %247 = arith.mulf %245, %246 : vector<4x128xf32>
    %248 = arith.addf %4, %247 : vector<4x128xf32>
    %249 = vector.extract_strided_slice %1 {offsets = [0, 1], sizes = [4, 1], strides = [1, 1]} : vector<4x4xf32> to vector<4x1xf32>
    %250 = vector.extract_strided_slice %242 {offsets = [1, 0], sizes = [1, 128], strides = [1, 1]} : vector<4x128xf32> to vector<1x128xf32>
    %251 = vector.broadcast %249 : vector<4x1xf32> to vector<4x128xf32>
    %252 = vector.broadcast %250 : vector<1x128xf32> to vector<4x128xf32>
    %253 = arith.mulf %251, %252 : vector<4x128xf32>
    %254 = arith.addf %248, %253 : vector<4x128xf32>
    %255 = vector.extract_strided_slice %1 {offsets = [0, 2], sizes = [4, 1], strides = [1, 1]} : vector<4x4xf32> to vector<4x1xf32>
    %256 = vector.extract_strided_slice %242 {offsets = [2, 0], sizes = [1, 128], strides = [1, 1]} : vector<4x128xf32> to vector<1x128xf32>
    %257 = vector.broadcast %255 : vector<4x1xf32> to vector<4x128xf32>
    %258 = vector.broadcast %256 : vector<1x128xf32> to vector<4x128xf32>
    %259 = arith.mulf %257, %258 : vector<4x128xf32>
    %260 = arith.addf %254, %259 : vector<4x128xf32>
    %261 = vector.extract_strided_slice %1 {offsets = [0, 3], sizes = [4, 1], strides = [1, 1]} : vector<4x4xf32> to vector<4x1xf32>
    %262 = vector.extract_strided_slice %242 {offsets = [3, 0], sizes = [1, 128], strides = [1, 1]} : vector<4x128xf32> to vector<1x128xf32>
    %263 = vector.broadcast %261 : vector<4x1xf32> to vector<4x128xf32>
    %264 = vector.broadcast %262 : vector<1x128xf32> to vector<4x128xf32>
    %265 = arith.mulf %263, %264 : vector<4x128xf32>
    %266 = arith.addf %260, %265 : vector<4x128xf32>
    %267 = math.tanh %266 : vector<4x128xf32>
    %cst_16 = arith.constant 6.250000e-02 : f32
    %268 = vector.broadcast %cst_16 : f32 to vector<4x128xf32>
    %269 = arith.mulf %268, %267 : vector<4x128xf32>
    %270 = arith.addf %242, %269 : vector<4x128xf32>
    %271 = vector.extract_strided_slice %1 {offsets = [0, 0], sizes = [4, 1], strides = [1, 1]} : vector<4x4xf32> to vector<4x1xf32>
    %272 = vector.extract_strided_slice %270 {offsets = [0, 0], sizes = [1, 128], strides = [1, 1]} : vector<4x128xf32> to vector<1x128xf32>
    %273 = vector.broadcast %271 : vector<4x1xf32> to vector<4x128xf32>
    %274 = vector.broadcast %272 : vector<1x128xf32> to vector<4x128xf32>
    %275 = arith.mulf %273, %274 : vector<4x128xf32>
    %276 = arith.addf %4, %275 : vector<4x128xf32>
    %277 = vector.extract_strided_slice %1 {offsets = [0, 1], sizes = [4, 1], strides = [1, 1]} : vector<4x4xf32> to vector<4x1xf32>
    %278 = vector.extract_strided_slice %270 {offsets = [1, 0], sizes = [1, 128], strides = [1, 1]} : vector<4x128xf32> to vector<1x128xf32>
    %279 = vector.broadcast %277 : vector<4x1xf32> to vector<4x128xf32>
    %280 = vector.broadcast %278 : vector<1x128xf32> to vector<4x128xf32>
    %281 = arith.mulf %279, %280 : vector<4x128xf32>
    %282 = arith.addf %276, %281 : vector<4x128xf32>
    %283 = vector.extract_strided_slice %1 {offsets = [0, 2], sizes = [4, 1], strides = [1, 1]} : vector<4x4xf32> to vector<4x1xf32>
    %284 = vector.extract_strided_slice %270 {offsets = [2, 0], sizes = [1, 128], strides = [1, 1]} : vector<4x128xf32> to vector<1x128xf32>
    %285 = vector.broadcast %283 : vector<4x1xf32> to vector<4x128xf32>
    %286 = vector.broadcast %284 : vector<1x128xf32> to vector<4x128xf32>
    %287 = arith.mulf %285, %286 : vector<4x128xf32>
    %288 = arith.addf %282, %287 : vector<4x128xf32>
    %289 = vector.extract_strided_slice %1 {offsets = [0, 3], sizes = [4, 1], strides = [1, 1]} : vector<4x4xf32> to vector<4x1xf32>
    %290 = vector.extract_strided_slice %270 {offsets = [3, 0], sizes = [1, 128], strides = [1, 1]} : vector<4x128xf32> to vector<1x128xf32>
    %291 = vector.broadcast %289 : vector<4x1xf32> to vector<4x128xf32>
    %292 = vector.broadcast %290 : vector<1x128xf32> to vector<4x128xf32>
    %293 = arith.mulf %291, %292 : vector<4x128xf32>
    %294 = arith.addf %288, %293 : vector<4x128xf32>
    %295 = math.tanh %294 : vector<4x128xf32>
    %cst_17 = arith.constant 6.250000e-02 : f32
    %296 = vector.broadcast %cst_17 : f32 to vector<4x128xf32>
    %297 = arith.mulf %296, %295 : vector<4x128xf32>
    %298 = arith.addf %242, %297 : vector<4x128xf32>
    %299 = vector.extract_strided_slice %1 {offsets = [0, 0], sizes = [4, 1], strides = [1, 1]} : vector<4x4xf32> to vector<4x1xf32>
    %300 = vector.extract_strided_slice %298 {offsets = [0, 0], sizes = [1, 128], strides = [1, 1]} : vector<4x128xf32> to vector<1x128xf32>
    %301 = vector.broadcast %299 : vector<4x1xf32> to vector<4x128xf32>
    %302 = vector.broadcast %300 : vector<1x128xf32> to vector<4x128xf32>
    %303 = arith.mulf %301, %302 : vector<4x128xf32>
    %304 = arith.addf %4, %303 : vector<4x128xf32>
    %305 = vector.extract_strided_slice %1 {offsets = [0, 1], sizes = [4, 1], strides = [1, 1]} : vector<4x4xf32> to vector<4x1xf32>
    %306 = vector.extract_strided_slice %298 {offsets = [1, 0], sizes = [1, 128], strides = [1, 1]} : vector<4x128xf32> to vector<1x128xf32>
    %307 = vector.broadcast %305 : vector<4x1xf32> to vector<4x128xf32>
    %308 = vector.broadcast %306 : vector<1x128xf32> to vector<4x128xf32>
    %309 = arith.mulf %307, %308 : vector<4x128xf32>
    %310 = arith.addf %304, %309 : vector<4x128xf32>
    %311 = vector.extract_strided_slice %1 {offsets = [0, 2], sizes = [4, 1], strides = [1, 1]} : vector<4x4xf32> to vector<4x1xf32>
    %312 = vector.extract_strided_slice %298 {offsets = [2, 0], sizes = [1, 128], strides = [1, 1]} : vector<4x128xf32> to vector<1x128xf32>
    %313 = vector.broadcast %311 : vector<4x1xf32> to vector<4x128xf32>
    %314 = vector.broadcast %312 : vector<1x128xf32> to vector<4x128xf32>
    %315 = arith.mulf %313, %314 : vector<4x128xf32>
    %316 = arith.addf %310, %315 : vector<4x128xf32>
    %317 = vector.extract_strided_slice %1 {offsets = [0, 3], sizes = [4, 1], strides = [1, 1]} : vector<4x4xf32> to vector<4x1xf32>
    %318 = vector.extract_strided_slice %298 {offsets = [3, 0], sizes = [1, 128], strides = [1, 1]} : vector<4x128xf32> to vector<1x128xf32>
    %319 = vector.broadcast %317 : vector<4x1xf32> to vector<4x128xf32>
    %320 = vector.broadcast %318 : vector<1x128xf32> to vector<4x128xf32>
    %321 = arith.mulf %319, %320 : vector<4x128xf32>
    %322 = arith.addf %316, %321 : vector<4x128xf32>
    %323 = math.tanh %322 : vector<4x128xf32>
    %cst_18 = arith.constant 1.250000e-01 : f32
    %324 = vector.broadcast %cst_18 : f32 to vector<4x128xf32>
    %325 = arith.mulf %324, %323 : vector<4x128xf32>
    %326 = arith.addf %242, %325 : vector<4x128xf32>
    %327 = vector.extract_strided_slice %1 {offsets = [0, 0], sizes = [4, 1], strides = [1, 1]} : vector<4x4xf32> to vector<4x1xf32>
    %328 = vector.extract_strided_slice %326 {offsets = [0, 0], sizes = [1, 128], strides = [1, 1]} : vector<4x128xf32> to vector<1x128xf32>
    %329 = vector.broadcast %327 : vector<4x1xf32> to vector<4x128xf32>
    %330 = vector.broadcast %328 : vector<1x128xf32> to vector<4x128xf32>
    %331 = arith.mulf %329, %330 : vector<4x128xf32>
    %332 = arith.addf %4, %331 : vector<4x128xf32>
    %333 = vector.extract_strided_slice %1 {offsets = [0, 1], sizes = [4, 1], strides = [1, 1]} : vector<4x4xf32> to vector<4x1xf32>
    %334 = vector.extract_strided_slice %326 {offsets = [1, 0], sizes = [1, 128], strides = [1, 1]} : vector<4x128xf32> to vector<1x128xf32>
    %335 = vector.broadcast %333 : vector<4x1xf32> to vector<4x128xf32>
    %336 = vector.broadcast %334 : vector<1x128xf32> to vector<4x128xf32>
    %337 = arith.mulf %335, %336 : vector<4x128xf32>
    %338 = arith.addf %332, %337 : vector<4x128xf32>
    %339 = vector.extract_strided_slice %1 {offsets = [0, 2], sizes = [4, 1], strides = [1, 1]} : vector<4x4xf32> to vector<4x1xf32>
    %340 = vector.extract_strided_slice %326 {offsets = [2, 0], sizes = [1, 128], strides = [1, 1]} : vector<4x128xf32> to vector<1x128xf32>
    %341 = vector.broadcast %339 : vector<4x1xf32> to vector<4x128xf32>
    %342 = vector.broadcast %340 : vector<1x128xf32> to vector<4x128xf32>
    %343 = arith.mulf %341, %342 : vector<4x128xf32>
    %344 = arith.addf %338, %343 : vector<4x128xf32>
    %345 = vector.extract_strided_slice %1 {offsets = [0, 3], sizes = [4, 1], strides = [1, 1]} : vector<4x4xf32> to vector<4x1xf32>
    %346 = vector.extract_strided_slice %326 {offsets = [3, 0], sizes = [1, 128], strides = [1, 1]} : vector<4x128xf32> to vector<1x128xf32>
    %347 = vector.broadcast %345 : vector<4x1xf32> to vector<4x128xf32>
    %348 = vector.broadcast %346 : vector<1x128xf32> to vector<4x128xf32>
    %349 = arith.mulf %347, %348 : vector<4x128xf32>
    %350 = arith.addf %344, %349 : vector<4x128xf32>
    %351 = math.tanh %350 : vector<4x128xf32>
    %cst_19 = arith.constant 2.000000e+00 : f32
    %352 = vector.broadcast %cst_19 : f32 to vector<4x128xf32>
    %353 = arith.mulf %352, %295 : vector<4x128xf32>
    %354 = arith.addf %267, %353 : vector<4x128xf32>
    %cst_20 = arith.constant 2.000000e+00 : f32
    %355 = vector.broadcast %cst_20 : f32 to vector<4x128xf32>
    %356 = arith.mulf %355, %323 : vector<4x128xf32>
    %357 = arith.addf %354, %356 : vector<4x128xf32>
    %358 = arith.addf %357, %351 : vector<4x128xf32>
    %cst_21 = arith.constant 0.020833334 : f32
    %359 = vector.broadcast %cst_21 : f32 to vector<4x128xf32>
    %360 = arith.mulf %359, %358 : vector<4x128xf32>
    %361 = arith.addf %242, %360 : vector<4x128xf32>
    %c3_i32 = arith.constant 3 : i32
    %362 = vector.extract_strided_slice %1 {offsets = [0, 0], sizes = [4, 1], strides = [1, 1]} : vector<4x4xf32> to vector<4x1xf32>
    %363 = vector.extract_strided_slice %361 {offsets = [0, 0], sizes = [1, 128], strides = [1, 1]} : vector<4x128xf32> to vector<1x128xf32>
    %364 = vector.broadcast %362 : vector<4x1xf32> to vector<4x128xf32>
    %365 = vector.broadcast %363 : vector<1x128xf32> to vector<4x128xf32>
    %366 = arith.mulf %364, %365 : vector<4x128xf32>
    %367 = arith.addf %4, %366 : vector<4x128xf32>
    %368 = vector.extract_strided_slice %1 {offsets = [0, 1], sizes = [4, 1], strides = [1, 1]} : vector<4x4xf32> to vector<4x1xf32>
    %369 = vector.extract_strided_slice %361 {offsets = [1, 0], sizes = [1, 128], strides = [1, 1]} : vector<4x128xf32> to vector<1x128xf32>
    %370 = vector.broadcast %368 : vector<4x1xf32> to vector<4x128xf32>
    %371 = vector.broadcast %369 : vector<1x128xf32> to vector<4x128xf32>
    %372 = arith.mulf %370, %371 : vector<4x128xf32>
    %373 = arith.addf %367, %372 : vector<4x128xf32>
    %374 = vector.extract_strided_slice %1 {offsets = [0, 2], sizes = [4, 1], strides = [1, 1]} : vector<4x4xf32> to vector<4x1xf32>
    %375 = vector.extract_strided_slice %361 {offsets = [2, 0], sizes = [1, 128], strides = [1, 1]} : vector<4x128xf32> to vector<1x128xf32>
    %376 = vector.broadcast %374 : vector<4x1xf32> to vector<4x128xf32>
    %377 = vector.broadcast %375 : vector<1x128xf32> to vector<4x128xf32>
    %378 = arith.mulf %376, %377 : vector<4x128xf32>
    %379 = arith.addf %373, %378 : vector<4x128xf32>
    %380 = vector.extract_strided_slice %1 {offsets = [0, 3], sizes = [4, 1], strides = [1, 1]} : vector<4x4xf32> to vector<4x1xf32>
    %381 = vector.extract_strided_slice %361 {offsets = [3, 0], sizes = [1, 128], strides = [1, 1]} : vector<4x128xf32> to vector<1x128xf32>
    %382 = vector.broadcast %380 : vector<4x1xf32> to vector<4x128xf32>
    %383 = vector.broadcast %381 : vector<1x128xf32> to vector<4x128xf32>
    %384 = arith.mulf %382, %383 : vector<4x128xf32>
    %385 = arith.addf %379, %384 : vector<4x128xf32>
    %386 = math.tanh %385 : vector<4x128xf32>
    %cst_22 = arith.constant 6.250000e-02 : f32
    %387 = vector.broadcast %cst_22 : f32 to vector<4x128xf32>
    %388 = arith.mulf %387, %386 : vector<4x128xf32>
    %389 = arith.addf %361, %388 : vector<4x128xf32>
    %390 = vector.extract_strided_slice %1 {offsets = [0, 0], sizes = [4, 1], strides = [1, 1]} : vector<4x4xf32> to vector<4x1xf32>
    %391 = vector.extract_strided_slice %389 {offsets = [0, 0], sizes = [1, 128], strides = [1, 1]} : vector<4x128xf32> to vector<1x128xf32>
    %392 = vector.broadcast %390 : vector<4x1xf32> to vector<4x128xf32>
    %393 = vector.broadcast %391 : vector<1x128xf32> to vector<4x128xf32>
    %394 = arith.mulf %392, %393 : vector<4x128xf32>
    %395 = arith.addf %4, %394 : vector<4x128xf32>
    %396 = vector.extract_strided_slice %1 {offsets = [0, 1], sizes = [4, 1], strides = [1, 1]} : vector<4x4xf32> to vector<4x1xf32>
    %397 = vector.extract_strided_slice %389 {offsets = [1, 0], sizes = [1, 128], strides = [1, 1]} : vector<4x128xf32> to vector<1x128xf32>
    %398 = vector.broadcast %396 : vector<4x1xf32> to vector<4x128xf32>
    %399 = vector.broadcast %397 : vector<1x128xf32> to vector<4x128xf32>
    %400 = arith.mulf %398, %399 : vector<4x128xf32>
    %401 = arith.addf %395, %400 : vector<4x128xf32>
    %402 = vector.extract_strided_slice %1 {offsets = [0, 2], sizes = [4, 1], strides = [1, 1]} : vector<4x4xf32> to vector<4x1xf32>
    %403 = vector.extract_strided_slice %389 {offsets = [2, 0], sizes = [1, 128], strides = [1, 1]} : vector<4x128xf32> to vector<1x128xf32>
    %404 = vector.broadcast %402 : vector<4x1xf32> to vector<4x128xf32>
    %405 = vector.broadcast %403 : vector<1x128xf32> to vector<4x128xf32>
    %406 = arith.mulf %404, %405 : vector<4x128xf32>
    %407 = arith.addf %401, %406 : vector<4x128xf32>
    %408 = vector.extract_strided_slice %1 {offsets = [0, 3], sizes = [4, 1], strides = [1, 1]} : vector<4x4xf32> to vector<4x1xf32>
    %409 = vector.extract_strided_slice %389 {offsets = [3, 0], sizes = [1, 128], strides = [1, 1]} : vector<4x128xf32> to vector<1x128xf32>
    %410 = vector.broadcast %408 : vector<4x1xf32> to vector<4x128xf32>
    %411 = vector.broadcast %409 : vector<1x128xf32> to vector<4x128xf32>
    %412 = arith.mulf %410, %411 : vector<4x128xf32>
    %413 = arith.addf %407, %412 : vector<4x128xf32>
    %414 = math.tanh %413 : vector<4x128xf32>
    %cst_23 = arith.constant 6.250000e-02 : f32
    %415 = vector.broadcast %cst_23 : f32 to vector<4x128xf32>
    %416 = arith.mulf %415, %414 : vector<4x128xf32>
    %417 = arith.addf %361, %416 : vector<4x128xf32>
    %418 = vector.extract_strided_slice %1 {offsets = [0, 0], sizes = [4, 1], strides = [1, 1]} : vector<4x4xf32> to vector<4x1xf32>
    %419 = vector.extract_strided_slice %417 {offsets = [0, 0], sizes = [1, 128], strides = [1, 1]} : vector<4x128xf32> to vector<1x128xf32>
    %420 = vector.broadcast %418 : vector<4x1xf32> to vector<4x128xf32>
    %421 = vector.broadcast %419 : vector<1x128xf32> to vector<4x128xf32>
    %422 = arith.mulf %420, %421 : vector<4x128xf32>
    %423 = arith.addf %4, %422 : vector<4x128xf32>
    %424 = vector.extract_strided_slice %1 {offsets = [0, 1], sizes = [4, 1], strides = [1, 1]} : vector<4x4xf32> to vector<4x1xf32>
    %425 = vector.extract_strided_slice %417 {offsets = [1, 0], sizes = [1, 128], strides = [1, 1]} : vector<4x128xf32> to vector<1x128xf32>
    %426 = vector.broadcast %424 : vector<4x1xf32> to vector<4x128xf32>
    %427 = vector.broadcast %425 : vector<1x128xf32> to vector<4x128xf32>
    %428 = arith.mulf %426, %427 : vector<4x128xf32>
    %429 = arith.addf %423, %428 : vector<4x128xf32>
    %430 = vector.extract_strided_slice %1 {offsets = [0, 2], sizes = [4, 1], strides = [1, 1]} : vector<4x4xf32> to vector<4x1xf32>
    %431 = vector.extract_strided_slice %417 {offsets = [2, 0], sizes = [1, 128], strides = [1, 1]} : vector<4x128xf32> to vector<1x128xf32>
    %432 = vector.broadcast %430 : vector<4x1xf32> to vector<4x128xf32>
    %433 = vector.broadcast %431 : vector<1x128xf32> to vector<4x128xf32>
    %434 = arith.mulf %432, %433 : vector<4x128xf32>
    %435 = arith.addf %429, %434 : vector<4x128xf32>
    %436 = vector.extract_strided_slice %1 {offsets = [0, 3], sizes = [4, 1], strides = [1, 1]} : vector<4x4xf32> to vector<4x1xf32>
    %437 = vector.extract_strided_slice %417 {offsets = [3, 0], sizes = [1, 128], strides = [1, 1]} : vector<4x128xf32> to vector<1x128xf32>
    %438 = vector.broadcast %436 : vector<4x1xf32> to vector<4x128xf32>
    %439 = vector.broadcast %437 : vector<1x128xf32> to vector<4x128xf32>
    %440 = arith.mulf %438, %439 : vector<4x128xf32>
    %441 = arith.addf %435, %440 : vector<4x128xf32>
    %442 = math.tanh %441 : vector<4x128xf32>
    %cst_24 = arith.constant 1.250000e-01 : f32
    %443 = vector.broadcast %cst_24 : f32 to vector<4x128xf32>
    %444 = arith.mulf %443, %442 : vector<4x128xf32>
    %445 = arith.addf %361, %444 : vector<4x128xf32>
    %446 = vector.extract_strided_slice %1 {offsets = [0, 0], sizes = [4, 1], strides = [1, 1]} : vector<4x4xf32> to vector<4x1xf32>
    %447 = vector.extract_strided_slice %445 {offsets = [0, 0], sizes = [1, 128], strides = [1, 1]} : vector<4x128xf32> to vector<1x128xf32>
    %448 = vector.broadcast %446 : vector<4x1xf32> to vector<4x128xf32>
    %449 = vector.broadcast %447 : vector<1x128xf32> to vector<4x128xf32>
    %450 = arith.mulf %448, %449 : vector<4x128xf32>
    %451 = arith.addf %4, %450 : vector<4x128xf32>
    %452 = vector.extract_strided_slice %1 {offsets = [0, 1], sizes = [4, 1], strides = [1, 1]} : vector<4x4xf32> to vector<4x1xf32>
    %453 = vector.extract_strided_slice %445 {offsets = [1, 0], sizes = [1, 128], strides = [1, 1]} : vector<4x128xf32> to vector<1x128xf32>
    %454 = vector.broadcast %452 : vector<4x1xf32> to vector<4x128xf32>
    %455 = vector.broadcast %453 : vector<1x128xf32> to vector<4x128xf32>
    %456 = arith.mulf %454, %455 : vector<4x128xf32>
    %457 = arith.addf %451, %456 : vector<4x128xf32>
    %458 = vector.extract_strided_slice %1 {offsets = [0, 2], sizes = [4, 1], strides = [1, 1]} : vector<4x4xf32> to vector<4x1xf32>
    %459 = vector.extract_strided_slice %445 {offsets = [2, 0], sizes = [1, 128], strides = [1, 1]} : vector<4x128xf32> to vector<1x128xf32>
    %460 = vector.broadcast %458 : vector<4x1xf32> to vector<4x128xf32>
    %461 = vector.broadcast %459 : vector<1x128xf32> to vector<4x128xf32>
    %462 = arith.mulf %460, %461 : vector<4x128xf32>
    %463 = arith.addf %457, %462 : vector<4x128xf32>
    %464 = vector.extract_strided_slice %1 {offsets = [0, 3], sizes = [4, 1], strides = [1, 1]} : vector<4x4xf32> to vector<4x1xf32>
    %465 = vector.extract_strided_slice %445 {offsets = [3, 0], sizes = [1, 128], strides = [1, 1]} : vector<4x128xf32> to vector<1x128xf32>
    %466 = vector.broadcast %464 : vector<4x1xf32> to vector<4x128xf32>
    %467 = vector.broadcast %465 : vector<1x128xf32> to vector<4x128xf32>
    %468 = arith.mulf %466, %467 : vector<4x128xf32>
    %469 = arith.addf %463, %468 : vector<4x128xf32>
    %470 = math.tanh %469 : vector<4x128xf32>
    %cst_25 = arith.constant 2.000000e+00 : f32
    %471 = vector.broadcast %cst_25 : f32 to vector<4x128xf32>
    %472 = arith.mulf %471, %414 : vector<4x128xf32>
    %473 = arith.addf %386, %472 : vector<4x128xf32>
    %cst_26 = arith.constant 2.000000e+00 : f32
    %474 = vector.broadcast %cst_26 : f32 to vector<4x128xf32>
    %475 = arith.mulf %474, %442 : vector<4x128xf32>
    %476 = arith.addf %473, %475 : vector<4x128xf32>
    %477 = arith.addf %476, %470 : vector<4x128xf32>
    %cst_27 = arith.constant 0.020833334 : f32
    %478 = vector.broadcast %cst_27 : f32 to vector<4x128xf32>
    %479 = arith.mulf %478, %477 : vector<4x128xf32>
    %480 = arith.addf %361, %479 : vector<4x128xf32>
    %c4_i32 = arith.constant 4 : i32
    %481 = vector.extract_strided_slice %1 {offsets = [0, 0], sizes = [4, 1], strides = [1, 1]} : vector<4x4xf32> to vector<4x1xf32>
    %482 = vector.extract_strided_slice %480 {offsets = [0, 0], sizes = [1, 128], strides = [1, 1]} : vector<4x128xf32> to vector<1x128xf32>
    %483 = vector.broadcast %481 : vector<4x1xf32> to vector<4x128xf32>
    %484 = vector.broadcast %482 : vector<1x128xf32> to vector<4x128xf32>
    %485 = arith.mulf %483, %484 : vector<4x128xf32>
    %486 = arith.addf %4, %485 : vector<4x128xf32>
    %487 = vector.extract_strided_slice %1 {offsets = [0, 1], sizes = [4, 1], strides = [1, 1]} : vector<4x4xf32> to vector<4x1xf32>
    %488 = vector.extract_strided_slice %480 {offsets = [1, 0], sizes = [1, 128], strides = [1, 1]} : vector<4x128xf32> to vector<1x128xf32>
    %489 = vector.broadcast %487 : vector<4x1xf32> to vector<4x128xf32>
    %490 = vector.broadcast %488 : vector<1x128xf32> to vector<4x128xf32>
    %491 = arith.mulf %489, %490 : vector<4x128xf32>
    %492 = arith.addf %486, %491 : vector<4x128xf32>
    %493 = vector.extract_strided_slice %1 {offsets = [0, 2], sizes = [4, 1], strides = [1, 1]} : vector<4x4xf32> to vector<4x1xf32>
    %494 = vector.extract_strided_slice %480 {offsets = [2, 0], sizes = [1, 128], strides = [1, 1]} : vector<4x128xf32> to vector<1x128xf32>
    %495 = vector.broadcast %493 : vector<4x1xf32> to vector<4x128xf32>
    %496 = vector.broadcast %494 : vector<1x128xf32> to vector<4x128xf32>
    %497 = arith.mulf %495, %496 : vector<4x128xf32>
    %498 = arith.addf %492, %497 : vector<4x128xf32>
    %499 = vector.extract_strided_slice %1 {offsets = [0, 3], sizes = [4, 1], strides = [1, 1]} : vector<4x4xf32> to vector<4x1xf32>
    %500 = vector.extract_strided_slice %480 {offsets = [3, 0], sizes = [1, 128], strides = [1, 1]} : vector<4x128xf32> to vector<1x128xf32>
    %501 = vector.broadcast %499 : vector<4x1xf32> to vector<4x128xf32>
    %502 = vector.broadcast %500 : vector<1x128xf32> to vector<4x128xf32>
    %503 = arith.mulf %501, %502 : vector<4x128xf32>
    %504 = arith.addf %498, %503 : vector<4x128xf32>
    %505 = math.tanh %504 : vector<4x128xf32>
    %cst_28 = arith.constant 6.250000e-02 : f32
    %506 = vector.broadcast %cst_28 : f32 to vector<4x128xf32>
    %507 = arith.mulf %506, %505 : vector<4x128xf32>
    %508 = arith.addf %480, %507 : vector<4x128xf32>
    %509 = vector.extract_strided_slice %1 {offsets = [0, 0], sizes = [4, 1], strides = [1, 1]} : vector<4x4xf32> to vector<4x1xf32>
    %510 = vector.extract_strided_slice %508 {offsets = [0, 0], sizes = [1, 128], strides = [1, 1]} : vector<4x128xf32> to vector<1x128xf32>
    %511 = vector.broadcast %509 : vector<4x1xf32> to vector<4x128xf32>
    %512 = vector.broadcast %510 : vector<1x128xf32> to vector<4x128xf32>
    %513 = arith.mulf %511, %512 : vector<4x128xf32>
    %514 = arith.addf %4, %513 : vector<4x128xf32>
    %515 = vector.extract_strided_slice %1 {offsets = [0, 1], sizes = [4, 1], strides = [1, 1]} : vector<4x4xf32> to vector<4x1xf32>
    %516 = vector.extract_strided_slice %508 {offsets = [1, 0], sizes = [1, 128], strides = [1, 1]} : vector<4x128xf32> to vector<1x128xf32>
    %517 = vector.broadcast %515 : vector<4x1xf32> to vector<4x128xf32>
    %518 = vector.broadcast %516 : vector<1x128xf32> to vector<4x128xf32>
    %519 = arith.mulf %517, %518 : vector<4x128xf32>
    %520 = arith.addf %514, %519 : vector<4x128xf32>
    %521 = vector.extract_strided_slice %1 {offsets = [0, 2], sizes = [4, 1], strides = [1, 1]} : vector<4x4xf32> to vector<4x1xf32>
    %522 = vector.extract_strided_slice %508 {offsets = [2, 0], sizes = [1, 128], strides = [1, 1]} : vector<4x128xf32> to vector<1x128xf32>
    %523 = vector.broadcast %521 : vector<4x1xf32> to vector<4x128xf32>
    %524 = vector.broadcast %522 : vector<1x128xf32> to vector<4x128xf32>
    %525 = arith.mulf %523, %524 : vector<4x128xf32>
    %526 = arith.addf %520, %525 : vector<4x128xf32>
    %527 = vector.extract_strided_slice %1 {offsets = [0, 3], sizes = [4, 1], strides = [1, 1]} : vector<4x4xf32> to vector<4x1xf32>
    %528 = vector.extract_strided_slice %508 {offsets = [3, 0], sizes = [1, 128], strides = [1, 1]} : vector<4x128xf32> to vector<1x128xf32>
    %529 = vector.broadcast %527 : vector<4x1xf32> to vector<4x128xf32>
    %530 = vector.broadcast %528 : vector<1x128xf32> to vector<4x128xf32>
    %531 = arith.mulf %529, %530 : vector<4x128xf32>
    %532 = arith.addf %526, %531 : vector<4x128xf32>
    %533 = math.tanh %532 : vector<4x128xf32>
    %cst_29 = arith.constant 6.250000e-02 : f32
    %534 = vector.broadcast %cst_29 : f32 to vector<4x128xf32>
    %535 = arith.mulf %534, %533 : vector<4x128xf32>
    %536 = arith.addf %480, %535 : vector<4x128xf32>
    %537 = vector.extract_strided_slice %1 {offsets = [0, 0], sizes = [4, 1], strides = [1, 1]} : vector<4x4xf32> to vector<4x1xf32>
    %538 = vector.extract_strided_slice %536 {offsets = [0, 0], sizes = [1, 128], strides = [1, 1]} : vector<4x128xf32> to vector<1x128xf32>
    %539 = vector.broadcast %537 : vector<4x1xf32> to vector<4x128xf32>
    %540 = vector.broadcast %538 : vector<1x128xf32> to vector<4x128xf32>
    %541 = arith.mulf %539, %540 : vector<4x128xf32>
    %542 = arith.addf %4, %541 : vector<4x128xf32>
    %543 = vector.extract_strided_slice %1 {offsets = [0, 1], sizes = [4, 1], strides = [1, 1]} : vector<4x4xf32> to vector<4x1xf32>
    %544 = vector.extract_strided_slice %536 {offsets = [1, 0], sizes = [1, 128], strides = [1, 1]} : vector<4x128xf32> to vector<1x128xf32>
    %545 = vector.broadcast %543 : vector<4x1xf32> to vector<4x128xf32>
    %546 = vector.broadcast %544 : vector<1x128xf32> to vector<4x128xf32>
    %547 = arith.mulf %545, %546 : vector<4x128xf32>
    %548 = arith.addf %542, %547 : vector<4x128xf32>
    %549 = vector.extract_strided_slice %1 {offsets = [0, 2], sizes = [4, 1], strides = [1, 1]} : vector<4x4xf32> to vector<4x1xf32>
    %550 = vector.extract_strided_slice %536 {offsets = [2, 0], sizes = [1, 128], strides = [1, 1]} : vector<4x128xf32> to vector<1x128xf32>
    %551 = vector.broadcast %549 : vector<4x1xf32> to vector<4x128xf32>
    %552 = vector.broadcast %550 : vector<1x128xf32> to vector<4x128xf32>
    %553 = arith.mulf %551, %552 : vector<4x128xf32>
    %554 = arith.addf %548, %553 : vector<4x128xf32>
    %555 = vector.extract_strided_slice %1 {offsets = [0, 3], sizes = [4, 1], strides = [1, 1]} : vector<4x4xf32> to vector<4x1xf32>
    %556 = vector.extract_strided_slice %536 {offsets = [3, 0], sizes = [1, 128], strides = [1, 1]} : vector<4x128xf32> to vector<1x128xf32>
    %557 = vector.broadcast %555 : vector<4x1xf32> to vector<4x128xf32>
    %558 = vector.broadcast %556 : vector<1x128xf32> to vector<4x128xf32>
    %559 = arith.mulf %557, %558 : vector<4x128xf32>
    %560 = arith.addf %554, %559 : vector<4x128xf32>
    %561 = math.tanh %560 : vector<4x128xf32>
    %cst_30 = arith.constant 1.250000e-01 : f32
    %562 = vector.broadcast %cst_30 : f32 to vector<4x128xf32>
    %563 = arith.mulf %562, %561 : vector<4x128xf32>
    %564 = arith.addf %480, %563 : vector<4x128xf32>
    %565 = vector.extract_strided_slice %1 {offsets = [0, 0], sizes = [4, 1], strides = [1, 1]} : vector<4x4xf32> to vector<4x1xf32>
    %566 = vector.extract_strided_slice %564 {offsets = [0, 0], sizes = [1, 128], strides = [1, 1]} : vector<4x128xf32> to vector<1x128xf32>
    %567 = vector.broadcast %565 : vector<4x1xf32> to vector<4x128xf32>
    %568 = vector.broadcast %566 : vector<1x128xf32> to vector<4x128xf32>
    %569 = arith.mulf %567, %568 : vector<4x128xf32>
    %570 = arith.addf %4, %569 : vector<4x128xf32>
    %571 = vector.extract_strided_slice %1 {offsets = [0, 1], sizes = [4, 1], strides = [1, 1]} : vector<4x4xf32> to vector<4x1xf32>
    %572 = vector.extract_strided_slice %564 {offsets = [1, 0], sizes = [1, 128], strides = [1, 1]} : vector<4x128xf32> to vector<1x128xf32>
    %573 = vector.broadcast %571 : vector<4x1xf32> to vector<4x128xf32>
    %574 = vector.broadcast %572 : vector<1x128xf32> to vector<4x128xf32>
    %575 = arith.mulf %573, %574 : vector<4x128xf32>
    %576 = arith.addf %570, %575 : vector<4x128xf32>
    %577 = vector.extract_strided_slice %1 {offsets = [0, 2], sizes = [4, 1], strides = [1, 1]} : vector<4x4xf32> to vector<4x1xf32>
    %578 = vector.extract_strided_slice %564 {offsets = [2, 0], sizes = [1, 128], strides = [1, 1]} : vector<4x128xf32> to vector<1x128xf32>
    %579 = vector.broadcast %577 : vector<4x1xf32> to vector<4x128xf32>
    %580 = vector.broadcast %578 : vector<1x128xf32> to vector<4x128xf32>
    %581 = arith.mulf %579, %580 : vector<4x128xf32>
    %582 = arith.addf %576, %581 : vector<4x128xf32>
    %583 = vector.extract_strided_slice %1 {offsets = [0, 3], sizes = [4, 1], strides = [1, 1]} : vector<4x4xf32> to vector<4x1xf32>
    %584 = vector.extract_strided_slice %564 {offsets = [3, 0], sizes = [1, 128], strides = [1, 1]} : vector<4x128xf32> to vector<1x128xf32>
    %585 = vector.broadcast %583 : vector<4x1xf32> to vector<4x128xf32>
    %586 = vector.broadcast %584 : vector<1x128xf32> to vector<4x128xf32>
    %587 = arith.mulf %585, %586 : vector<4x128xf32>
    %588 = arith.addf %582, %587 : vector<4x128xf32>
    %589 = math.tanh %588 : vector<4x128xf32>
    %cst_31 = arith.constant 2.000000e+00 : f32
    %590 = vector.broadcast %cst_31 : f32 to vector<4x128xf32>
    %591 = arith.mulf %590, %533 : vector<4x128xf32>
    %592 = arith.addf %505, %591 : vector<4x128xf32>
    %cst_32 = arith.constant 2.000000e+00 : f32
    %593 = vector.broadcast %cst_32 : f32 to vector<4x128xf32>
    %594 = arith.mulf %593, %561 : vector<4x128xf32>
    %595 = arith.addf %592, %594 : vector<4x128xf32>
    %596 = arith.addf %595, %589 : vector<4x128xf32>
    %cst_33 = arith.constant 0.020833334 : f32
    %597 = vector.broadcast %cst_33 : f32 to vector<4x128xf32>
    %598 = arith.mulf %597, %596 : vector<4x128xf32>
    %599 = arith.addf %480, %598 : vector<4x128xf32>
    %c5_i32 = arith.constant 5 : i32
    %600 = vector.extract_strided_slice %1 {offsets = [0, 0], sizes = [4, 1], strides = [1, 1]} : vector<4x4xf32> to vector<4x1xf32>
    %601 = vector.extract_strided_slice %599 {offsets = [0, 0], sizes = [1, 128], strides = [1, 1]} : vector<4x128xf32> to vector<1x128xf32>
    %602 = vector.broadcast %600 : vector<4x1xf32> to vector<4x128xf32>
    %603 = vector.broadcast %601 : vector<1x128xf32> to vector<4x128xf32>
    %604 = arith.mulf %602, %603 : vector<4x128xf32>
    %605 = arith.addf %4, %604 : vector<4x128xf32>
    %606 = vector.extract_strided_slice %1 {offsets = [0, 1], sizes = [4, 1], strides = [1, 1]} : vector<4x4xf32> to vector<4x1xf32>
    %607 = vector.extract_strided_slice %599 {offsets = [1, 0], sizes = [1, 128], strides = [1, 1]} : vector<4x128xf32> to vector<1x128xf32>
    %608 = vector.broadcast %606 : vector<4x1xf32> to vector<4x128xf32>
    %609 = vector.broadcast %607 : vector<1x128xf32> to vector<4x128xf32>
    %610 = arith.mulf %608, %609 : vector<4x128xf32>
    %611 = arith.addf %605, %610 : vector<4x128xf32>
    %612 = vector.extract_strided_slice %1 {offsets = [0, 2], sizes = [4, 1], strides = [1, 1]} : vector<4x4xf32> to vector<4x1xf32>
    %613 = vector.extract_strided_slice %599 {offsets = [2, 0], sizes = [1, 128], strides = [1, 1]} : vector<4x128xf32> to vector<1x128xf32>
    %614 = vector.broadcast %612 : vector<4x1xf32> to vector<4x128xf32>
    %615 = vector.broadcast %613 : vector<1x128xf32> to vector<4x128xf32>
    %616 = arith.mulf %614, %615 : vector<4x128xf32>
    %617 = arith.addf %611, %616 : vector<4x128xf32>
    %618 = vector.extract_strided_slice %1 {offsets = [0, 3], sizes = [4, 1], strides = [1, 1]} : vector<4x4xf32> to vector<4x1xf32>
    %619 = vector.extract_strided_slice %599 {offsets = [3, 0], sizes = [1, 128], strides = [1, 1]} : vector<4x128xf32> to vector<1x128xf32>
    %620 = vector.broadcast %618 : vector<4x1xf32> to vector<4x128xf32>
    %621 = vector.broadcast %619 : vector<1x128xf32> to vector<4x128xf32>
    %622 = arith.mulf %620, %621 : vector<4x128xf32>
    %623 = arith.addf %617, %622 : vector<4x128xf32>
    %624 = math.tanh %623 : vector<4x128xf32>
    %cst_34 = arith.constant 6.250000e-02 : f32
    %625 = vector.broadcast %cst_34 : f32 to vector<4x128xf32>
    %626 = arith.mulf %625, %624 : vector<4x128xf32>
    %627 = arith.addf %599, %626 : vector<4x128xf32>
    %628 = vector.extract_strided_slice %1 {offsets = [0, 0], sizes = [4, 1], strides = [1, 1]} : vector<4x4xf32> to vector<4x1xf32>
    %629 = vector.extract_strided_slice %627 {offsets = [0, 0], sizes = [1, 128], strides = [1, 1]} : vector<4x128xf32> to vector<1x128xf32>
    %630 = vector.broadcast %628 : vector<4x1xf32> to vector<4x128xf32>
    %631 = vector.broadcast %629 : vector<1x128xf32> to vector<4x128xf32>
    %632 = arith.mulf %630, %631 : vector<4x128xf32>
    %633 = arith.addf %4, %632 : vector<4x128xf32>
    %634 = vector.extract_strided_slice %1 {offsets = [0, 1], sizes = [4, 1], strides = [1, 1]} : vector<4x4xf32> to vector<4x1xf32>
    %635 = vector.extract_strided_slice %627 {offsets = [1, 0], sizes = [1, 128], strides = [1, 1]} : vector<4x128xf32> to vector<1x128xf32>
    %636 = vector.broadcast %634 : vector<4x1xf32> to vector<4x128xf32>
    %637 = vector.broadcast %635 : vector<1x128xf32> to vector<4x128xf32>
    %638 = arith.mulf %636, %637 : vector<4x128xf32>
    %639 = arith.addf %633, %638 : vector<4x128xf32>
    %640 = vector.extract_strided_slice %1 {offsets = [0, 2], sizes = [4, 1], strides = [1, 1]} : vector<4x4xf32> to vector<4x1xf32>
    %641 = vector.extract_strided_slice %627 {offsets = [2, 0], sizes = [1, 128], strides = [1, 1]} : vector<4x128xf32> to vector<1x128xf32>
    %642 = vector.broadcast %640 : vector<4x1xf32> to vector<4x128xf32>
    %643 = vector.broadcast %641 : vector<1x128xf32> to vector<4x128xf32>
    %644 = arith.mulf %642, %643 : vector<4x128xf32>
    %645 = arith.addf %639, %644 : vector<4x128xf32>
    %646 = vector.extract_strided_slice %1 {offsets = [0, 3], sizes = [4, 1], strides = [1, 1]} : vector<4x4xf32> to vector<4x1xf32>
    %647 = vector.extract_strided_slice %627 {offsets = [3, 0], sizes = [1, 128], strides = [1, 1]} : vector<4x128xf32> to vector<1x128xf32>
    %648 = vector.broadcast %646 : vector<4x1xf32> to vector<4x128xf32>
    %649 = vector.broadcast %647 : vector<1x128xf32> to vector<4x128xf32>
    %650 = arith.mulf %648, %649 : vector<4x128xf32>
    %651 = arith.addf %645, %650 : vector<4x128xf32>
    %652 = math.tanh %651 : vector<4x128xf32>
    %cst_35 = arith.constant 6.250000e-02 : f32
    %653 = vector.broadcast %cst_35 : f32 to vector<4x128xf32>
    %654 = arith.mulf %653, %652 : vector<4x128xf32>
    %655 = arith.addf %599, %654 : vector<4x128xf32>
    %656 = vector.extract_strided_slice %1 {offsets = [0, 0], sizes = [4, 1], strides = [1, 1]} : vector<4x4xf32> to vector<4x1xf32>
    %657 = vector.extract_strided_slice %655 {offsets = [0, 0], sizes = [1, 128], strides = [1, 1]} : vector<4x128xf32> to vector<1x128xf32>
    %658 = vector.broadcast %656 : vector<4x1xf32> to vector<4x128xf32>
    %659 = vector.broadcast %657 : vector<1x128xf32> to vector<4x128xf32>
    %660 = arith.mulf %658, %659 : vector<4x128xf32>
    %661 = arith.addf %4, %660 : vector<4x128xf32>
    %662 = vector.extract_strided_slice %1 {offsets = [0, 1], sizes = [4, 1], strides = [1, 1]} : vector<4x4xf32> to vector<4x1xf32>
    %663 = vector.extract_strided_slice %655 {offsets = [1, 0], sizes = [1, 128], strides = [1, 1]} : vector<4x128xf32> to vector<1x128xf32>
    %664 = vector.broadcast %662 : vector<4x1xf32> to vector<4x128xf32>
    %665 = vector.broadcast %663 : vector<1x128xf32> to vector<4x128xf32>
    %666 = arith.mulf %664, %665 : vector<4x128xf32>
    %667 = arith.addf %661, %666 : vector<4x128xf32>
    %668 = vector.extract_strided_slice %1 {offsets = [0, 2], sizes = [4, 1], strides = [1, 1]} : vector<4x4xf32> to vector<4x1xf32>
    %669 = vector.extract_strided_slice %655 {offsets = [2, 0], sizes = [1, 128], strides = [1, 1]} : vector<4x128xf32> to vector<1x128xf32>
    %670 = vector.broadcast %668 : vector<4x1xf32> to vector<4x128xf32>
    %671 = vector.broadcast %669 : vector<1x128xf32> to vector<4x128xf32>
    %672 = arith.mulf %670, %671 : vector<4x128xf32>
    %673 = arith.addf %667, %672 : vector<4x128xf32>
    %674 = vector.extract_strided_slice %1 {offsets = [0, 3], sizes = [4, 1], strides = [1, 1]} : vector<4x4xf32> to vector<4x1xf32>
    %675 = vector.extract_strided_slice %655 {offsets = [3, 0], sizes = [1, 128], strides = [1, 1]} : vector<4x128xf32> to vector<1x128xf32>
    %676 = vector.broadcast %674 : vector<4x1xf32> to vector<4x128xf32>
    %677 = vector.broadcast %675 : vector<1x128xf32> to vector<4x128xf32>
    %678 = arith.mulf %676, %677 : vector<4x128xf32>
    %679 = arith.addf %673, %678 : vector<4x128xf32>
    %680 = math.tanh %679 : vector<4x128xf32>
    %cst_36 = arith.constant 1.250000e-01 : f32
    %681 = vector.broadcast %cst_36 : f32 to vector<4x128xf32>
    %682 = arith.mulf %681, %680 : vector<4x128xf32>
    %683 = arith.addf %599, %682 : vector<4x128xf32>
    %684 = vector.extract_strided_slice %1 {offsets = [0, 0], sizes = [4, 1], strides = [1, 1]} : vector<4x4xf32> to vector<4x1xf32>
    %685 = vector.extract_strided_slice %683 {offsets = [0, 0], sizes = [1, 128], strides = [1, 1]} : vector<4x128xf32> to vector<1x128xf32>
    %686 = vector.broadcast %684 : vector<4x1xf32> to vector<4x128xf32>
    %687 = vector.broadcast %685 : vector<1x128xf32> to vector<4x128xf32>
    %688 = arith.mulf %686, %687 : vector<4x128xf32>
    %689 = arith.addf %4, %688 : vector<4x128xf32>
    %690 = vector.extract_strided_slice %1 {offsets = [0, 1], sizes = [4, 1], strides = [1, 1]} : vector<4x4xf32> to vector<4x1xf32>
    %691 = vector.extract_strided_slice %683 {offsets = [1, 0], sizes = [1, 128], strides = [1, 1]} : vector<4x128xf32> to vector<1x128xf32>
    %692 = vector.broadcast %690 : vector<4x1xf32> to vector<4x128xf32>
    %693 = vector.broadcast %691 : vector<1x128xf32> to vector<4x128xf32>
    %694 = arith.mulf %692, %693 : vector<4x128xf32>
    %695 = arith.addf %689, %694 : vector<4x128xf32>
    %696 = vector.extract_strided_slice %1 {offsets = [0, 2], sizes = [4, 1], strides = [1, 1]} : vector<4x4xf32> to vector<4x1xf32>
    %697 = vector.extract_strided_slice %683 {offsets = [2, 0], sizes = [1, 128], strides = [1, 1]} : vector<4x128xf32> to vector<1x128xf32>
    %698 = vector.broadcast %696 : vector<4x1xf32> to vector<4x128xf32>
    %699 = vector.broadcast %697 : vector<1x128xf32> to vector<4x128xf32>
    %700 = arith.mulf %698, %699 : vector<4x128xf32>
    %701 = arith.addf %695, %700 : vector<4x128xf32>
    %702 = vector.extract_strided_slice %1 {offsets = [0, 3], sizes = [4, 1], strides = [1, 1]} : vector<4x4xf32> to vector<4x1xf32>
    %703 = vector.extract_strided_slice %683 {offsets = [3, 0], sizes = [1, 128], strides = [1, 1]} : vector<4x128xf32> to vector<1x128xf32>
    %704 = vector.broadcast %702 : vector<4x1xf32> to vector<4x128xf32>
    %705 = vector.broadcast %703 : vector<1x128xf32> to vector<4x128xf32>
    %706 = arith.mulf %704, %705 : vector<4x128xf32>
    %707 = arith.addf %701, %706 : vector<4x128xf32>
    %708 = math.tanh %707 : vector<4x128xf32>
    %cst_37 = arith.constant 2.000000e+00 : f32
    %709 = vector.broadcast %cst_37 : f32 to vector<4x128xf32>
    %710 = arith.mulf %709, %652 : vector<4x128xf32>
    %711 = arith.addf %624, %710 : vector<4x128xf32>
    %cst_38 = arith.constant 2.000000e+00 : f32
    %712 = vector.broadcast %cst_38 : f32 to vector<4x128xf32>
    %713 = arith.mulf %712, %680 : vector<4x128xf32>
    %714 = arith.addf %711, %713 : vector<4x128xf32>
    %715 = arith.addf %714, %708 : vector<4x128xf32>
    %cst_39 = arith.constant 0.020833334 : f32
    %716 = vector.broadcast %cst_39 : f32 to vector<4x128xf32>
    %717 = arith.mulf %716, %715 : vector<4x128xf32>
    %718 = arith.addf %599, %717 : vector<4x128xf32>
    %c6_i32 = arith.constant 6 : i32
    %719 = vector.extract_strided_slice %1 {offsets = [0, 0], sizes = [4, 1], strides = [1, 1]} : vector<4x4xf32> to vector<4x1xf32>
    %720 = vector.extract_strided_slice %718 {offsets = [0, 0], sizes = [1, 128], strides = [1, 1]} : vector<4x128xf32> to vector<1x128xf32>
    %721 = vector.broadcast %719 : vector<4x1xf32> to vector<4x128xf32>
    %722 = vector.broadcast %720 : vector<1x128xf32> to vector<4x128xf32>
    %723 = arith.mulf %721, %722 : vector<4x128xf32>
    %724 = arith.addf %4, %723 : vector<4x128xf32>
    %725 = vector.extract_strided_slice %1 {offsets = [0, 1], sizes = [4, 1], strides = [1, 1]} : vector<4x4xf32> to vector<4x1xf32>
    %726 = vector.extract_strided_slice %718 {offsets = [1, 0], sizes = [1, 128], strides = [1, 1]} : vector<4x128xf32> to vector<1x128xf32>
    %727 = vector.broadcast %725 : vector<4x1xf32> to vector<4x128xf32>
    %728 = vector.broadcast %726 : vector<1x128xf32> to vector<4x128xf32>
    %729 = arith.mulf %727, %728 : vector<4x128xf32>
    %730 = arith.addf %724, %729 : vector<4x128xf32>
    %731 = vector.extract_strided_slice %1 {offsets = [0, 2], sizes = [4, 1], strides = [1, 1]} : vector<4x4xf32> to vector<4x1xf32>
    %732 = vector.extract_strided_slice %718 {offsets = [2, 0], sizes = [1, 128], strides = [1, 1]} : vector<4x128xf32> to vector<1x128xf32>
    %733 = vector.broadcast %731 : vector<4x1xf32> to vector<4x128xf32>
    %734 = vector.broadcast %732 : vector<1x128xf32> to vector<4x128xf32>
    %735 = arith.mulf %733, %734 : vector<4x128xf32>
    %736 = arith.addf %730, %735 : vector<4x128xf32>
    %737 = vector.extract_strided_slice %1 {offsets = [0, 3], sizes = [4, 1], strides = [1, 1]} : vector<4x4xf32> to vector<4x1xf32>
    %738 = vector.extract_strided_slice %718 {offsets = [3, 0], sizes = [1, 128], strides = [1, 1]} : vector<4x128xf32> to vector<1x128xf32>
    %739 = vector.broadcast %737 : vector<4x1xf32> to vector<4x128xf32>
    %740 = vector.broadcast %738 : vector<1x128xf32> to vector<4x128xf32>
    %741 = arith.mulf %739, %740 : vector<4x128xf32>
    %742 = arith.addf %736, %741 : vector<4x128xf32>
    %743 = math.tanh %742 : vector<4x128xf32>
    %cst_40 = arith.constant 6.250000e-02 : f32
    %744 = vector.broadcast %cst_40 : f32 to vector<4x128xf32>
    %745 = arith.mulf %744, %743 : vector<4x128xf32>
    %746 = arith.addf %718, %745 : vector<4x128xf32>
    %747 = vector.extract_strided_slice %1 {offsets = [0, 0], sizes = [4, 1], strides = [1, 1]} : vector<4x4xf32> to vector<4x1xf32>
    %748 = vector.extract_strided_slice %746 {offsets = [0, 0], sizes = [1, 128], strides = [1, 1]} : vector<4x128xf32> to vector<1x128xf32>
    %749 = vector.broadcast %747 : vector<4x1xf32> to vector<4x128xf32>
    %750 = vector.broadcast %748 : vector<1x128xf32> to vector<4x128xf32>
    %751 = arith.mulf %749, %750 : vector<4x128xf32>
    %752 = arith.addf %4, %751 : vector<4x128xf32>
    %753 = vector.extract_strided_slice %1 {offsets = [0, 1], sizes = [4, 1], strides = [1, 1]} : vector<4x4xf32> to vector<4x1xf32>
    %754 = vector.extract_strided_slice %746 {offsets = [1, 0], sizes = [1, 128], strides = [1, 1]} : vector<4x128xf32> to vector<1x128xf32>
    %755 = vector.broadcast %753 : vector<4x1xf32> to vector<4x128xf32>
    %756 = vector.broadcast %754 : vector<1x128xf32> to vector<4x128xf32>
    %757 = arith.mulf %755, %756 : vector<4x128xf32>
    %758 = arith.addf %752, %757 : vector<4x128xf32>
    %759 = vector.extract_strided_slice %1 {offsets = [0, 2], sizes = [4, 1], strides = [1, 1]} : vector<4x4xf32> to vector<4x1xf32>
    %760 = vector.extract_strided_slice %746 {offsets = [2, 0], sizes = [1, 128], strides = [1, 1]} : vector<4x128xf32> to vector<1x128xf32>
    %761 = vector.broadcast %759 : vector<4x1xf32> to vector<4x128xf32>
    %762 = vector.broadcast %760 : vector<1x128xf32> to vector<4x128xf32>
    %763 = arith.mulf %761, %762 : vector<4x128xf32>
    %764 = arith.addf %758, %763 : vector<4x128xf32>
    %765 = vector.extract_strided_slice %1 {offsets = [0, 3], sizes = [4, 1], strides = [1, 1]} : vector<4x4xf32> to vector<4x1xf32>
    %766 = vector.extract_strided_slice %746 {offsets = [3, 0], sizes = [1, 128], strides = [1, 1]} : vector<4x128xf32> to vector<1x128xf32>
    %767 = vector.broadcast %765 : vector<4x1xf32> to vector<4x128xf32>
    %768 = vector.broadcast %766 : vector<1x128xf32> to vector<4x128xf32>
    %769 = arith.mulf %767, %768 : vector<4x128xf32>
    %770 = arith.addf %764, %769 : vector<4x128xf32>
    %771 = math.tanh %770 : vector<4x128xf32>
    %cst_41 = arith.constant 6.250000e-02 : f32
    %772 = vector.broadcast %cst_41 : f32 to vector<4x128xf32>
    %773 = arith.mulf %772, %771 : vector<4x128xf32>
    %774 = arith.addf %718, %773 : vector<4x128xf32>
    %775 = vector.extract_strided_slice %1 {offsets = [0, 0], sizes = [4, 1], strides = [1, 1]} : vector<4x4xf32> to vector<4x1xf32>
    %776 = vector.extract_strided_slice %774 {offsets = [0, 0], sizes = [1, 128], strides = [1, 1]} : vector<4x128xf32> to vector<1x128xf32>
    %777 = vector.broadcast %775 : vector<4x1xf32> to vector<4x128xf32>
    %778 = vector.broadcast %776 : vector<1x128xf32> to vector<4x128xf32>
    %779 = arith.mulf %777, %778 : vector<4x128xf32>
    %780 = arith.addf %4, %779 : vector<4x128xf32>
    %781 = vector.extract_strided_slice %1 {offsets = [0, 1], sizes = [4, 1], strides = [1, 1]} : vector<4x4xf32> to vector<4x1xf32>
    %782 = vector.extract_strided_slice %774 {offsets = [1, 0], sizes = [1, 128], strides = [1, 1]} : vector<4x128xf32> to vector<1x128xf32>
    %783 = vector.broadcast %781 : vector<4x1xf32> to vector<4x128xf32>
    %784 = vector.broadcast %782 : vector<1x128xf32> to vector<4x128xf32>
    %785 = arith.mulf %783, %784 : vector<4x128xf32>
    %786 = arith.addf %780, %785 : vector<4x128xf32>
    %787 = vector.extract_strided_slice %1 {offsets = [0, 2], sizes = [4, 1], strides = [1, 1]} : vector<4x4xf32> to vector<4x1xf32>
    %788 = vector.extract_strided_slice %774 {offsets = [2, 0], sizes = [1, 128], strides = [1, 1]} : vector<4x128xf32> to vector<1x128xf32>
    %789 = vector.broadcast %787 : vector<4x1xf32> to vector<4x128xf32>
    %790 = vector.broadcast %788 : vector<1x128xf32> to vector<4x128xf32>
    %791 = arith.mulf %789, %790 : vector<4x128xf32>
    %792 = arith.addf %786, %791 : vector<4x128xf32>
    %793 = vector.extract_strided_slice %1 {offsets = [0, 3], sizes = [4, 1], strides = [1, 1]} : vector<4x4xf32> to vector<4x1xf32>
    %794 = vector.extract_strided_slice %774 {offsets = [3, 0], sizes = [1, 128], strides = [1, 1]} : vector<4x128xf32> to vector<1x128xf32>
    %795 = vector.broadcast %793 : vector<4x1xf32> to vector<4x128xf32>
    %796 = vector.broadcast %794 : vector<1x128xf32> to vector<4x128xf32>
    %797 = arith.mulf %795, %796 : vector<4x128xf32>
    %798 = arith.addf %792, %797 : vector<4x128xf32>
    %799 = math.tanh %798 : vector<4x128xf32>
    %cst_42 = arith.constant 1.250000e-01 : f32
    %800 = vector.broadcast %cst_42 : f32 to vector<4x128xf32>
    %801 = arith.mulf %800, %799 : vector<4x128xf32>
    %802 = arith.addf %718, %801 : vector<4x128xf32>
    %803 = vector.extract_strided_slice %1 {offsets = [0, 0], sizes = [4, 1], strides = [1, 1]} : vector<4x4xf32> to vector<4x1xf32>
    %804 = vector.extract_strided_slice %802 {offsets = [0, 0], sizes = [1, 128], strides = [1, 1]} : vector<4x128xf32> to vector<1x128xf32>
    %805 = vector.broadcast %803 : vector<4x1xf32> to vector<4x128xf32>
    %806 = vector.broadcast %804 : vector<1x128xf32> to vector<4x128xf32>
    %807 = arith.mulf %805, %806 : vector<4x128xf32>
    %808 = arith.addf %4, %807 : vector<4x128xf32>
    %809 = vector.extract_strided_slice %1 {offsets = [0, 1], sizes = [4, 1], strides = [1, 1]} : vector<4x4xf32> to vector<4x1xf32>
    %810 = vector.extract_strided_slice %802 {offsets = [1, 0], sizes = [1, 128], strides = [1, 1]} : vector<4x128xf32> to vector<1x128xf32>
    %811 = vector.broadcast %809 : vector<4x1xf32> to vector<4x128xf32>
    %812 = vector.broadcast %810 : vector<1x128xf32> to vector<4x128xf32>
    %813 = arith.mulf %811, %812 : vector<4x128xf32>
    %814 = arith.addf %808, %813 : vector<4x128xf32>
    %815 = vector.extract_strided_slice %1 {offsets = [0, 2], sizes = [4, 1], strides = [1, 1]} : vector<4x4xf32> to vector<4x1xf32>
    %816 = vector.extract_strided_slice %802 {offsets = [2, 0], sizes = [1, 128], strides = [1, 1]} : vector<4x128xf32> to vector<1x128xf32>
    %817 = vector.broadcast %815 : vector<4x1xf32> to vector<4x128xf32>
    %818 = vector.broadcast %816 : vector<1x128xf32> to vector<4x128xf32>
    %819 = arith.mulf %817, %818 : vector<4x128xf32>
    %820 = arith.addf %814, %819 : vector<4x128xf32>
    %821 = vector.extract_strided_slice %1 {offsets = [0, 3], sizes = [4, 1], strides = [1, 1]} : vector<4x4xf32> to vector<4x1xf32>
    %822 = vector.extract_strided_slice %802 {offsets = [3, 0], sizes = [1, 128], strides = [1, 1]} : vector<4x128xf32> to vector<1x128xf32>
    %823 = vector.broadcast %821 : vector<4x1xf32> to vector<4x128xf32>
    %824 = vector.broadcast %822 : vector<1x128xf32> to vector<4x128xf32>
    %825 = arith.mulf %823, %824 : vector<4x128xf32>
    %826 = arith.addf %820, %825 : vector<4x128xf32>
    %827 = math.tanh %826 : vector<4x128xf32>
    %cst_43 = arith.constant 2.000000e+00 : f32
    %828 = vector.broadcast %cst_43 : f32 to vector<4x128xf32>
    %829 = arith.mulf %828, %771 : vector<4x128xf32>
    %830 = arith.addf %743, %829 : vector<4x128xf32>
    %cst_44 = arith.constant 2.000000e+00 : f32
    %831 = vector.broadcast %cst_44 : f32 to vector<4x128xf32>
    %832 = arith.mulf %831, %799 : vector<4x128xf32>
    %833 = arith.addf %830, %832 : vector<4x128xf32>
    %834 = arith.addf %833, %827 : vector<4x128xf32>
    %cst_45 = arith.constant 0.020833334 : f32
    %835 = vector.broadcast %cst_45 : f32 to vector<4x128xf32>
    %836 = arith.mulf %835, %834 : vector<4x128xf32>
    %837 = arith.addf %718, %836 : vector<4x128xf32>
    %c7_i32 = arith.constant 7 : i32
    %838 = vector.extract_strided_slice %1 {offsets = [0, 0], sizes = [4, 1], strides = [1, 1]} : vector<4x4xf32> to vector<4x1xf32>
    %839 = vector.extract_strided_slice %837 {offsets = [0, 0], sizes = [1, 128], strides = [1, 1]} : vector<4x128xf32> to vector<1x128xf32>
    %840 = vector.broadcast %838 : vector<4x1xf32> to vector<4x128xf32>
    %841 = vector.broadcast %839 : vector<1x128xf32> to vector<4x128xf32>
    %842 = arith.mulf %840, %841 : vector<4x128xf32>
    %843 = arith.addf %4, %842 : vector<4x128xf32>
    %844 = vector.extract_strided_slice %1 {offsets = [0, 1], sizes = [4, 1], strides = [1, 1]} : vector<4x4xf32> to vector<4x1xf32>
    %845 = vector.extract_strided_slice %837 {offsets = [1, 0], sizes = [1, 128], strides = [1, 1]} : vector<4x128xf32> to vector<1x128xf32>
    %846 = vector.broadcast %844 : vector<4x1xf32> to vector<4x128xf32>
    %847 = vector.broadcast %845 : vector<1x128xf32> to vector<4x128xf32>
    %848 = arith.mulf %846, %847 : vector<4x128xf32>
    %849 = arith.addf %843, %848 : vector<4x128xf32>
    %850 = vector.extract_strided_slice %1 {offsets = [0, 2], sizes = [4, 1], strides = [1, 1]} : vector<4x4xf32> to vector<4x1xf32>
    %851 = vector.extract_strided_slice %837 {offsets = [2, 0], sizes = [1, 128], strides = [1, 1]} : vector<4x128xf32> to vector<1x128xf32>
    %852 = vector.broadcast %850 : vector<4x1xf32> to vector<4x128xf32>
    %853 = vector.broadcast %851 : vector<1x128xf32> to vector<4x128xf32>
    %854 = arith.mulf %852, %853 : vector<4x128xf32>
    %855 = arith.addf %849, %854 : vector<4x128xf32>
    %856 = vector.extract_strided_slice %1 {offsets = [0, 3], sizes = [4, 1], strides = [1, 1]} : vector<4x4xf32> to vector<4x1xf32>
    %857 = vector.extract_strided_slice %837 {offsets = [3, 0], sizes = [1, 128], strides = [1, 1]} : vector<4x128xf32> to vector<1x128xf32>
    %858 = vector.broadcast %856 : vector<4x1xf32> to vector<4x128xf32>
    %859 = vector.broadcast %857 : vector<1x128xf32> to vector<4x128xf32>
    %860 = arith.mulf %858, %859 : vector<4x128xf32>
    %861 = arith.addf %855, %860 : vector<4x128xf32>
    %862 = math.tanh %861 : vector<4x128xf32>
    %cst_46 = arith.constant 6.250000e-02 : f32
    %863 = vector.broadcast %cst_46 : f32 to vector<4x128xf32>
    %864 = arith.mulf %863, %862 : vector<4x128xf32>
    %865 = arith.addf %837, %864 : vector<4x128xf32>
    %866 = vector.extract_strided_slice %1 {offsets = [0, 0], sizes = [4, 1], strides = [1, 1]} : vector<4x4xf32> to vector<4x1xf32>
    %867 = vector.extract_strided_slice %865 {offsets = [0, 0], sizes = [1, 128], strides = [1, 1]} : vector<4x128xf32> to vector<1x128xf32>
    %868 = vector.broadcast %866 : vector<4x1xf32> to vector<4x128xf32>
    %869 = vector.broadcast %867 : vector<1x128xf32> to vector<4x128xf32>
    %870 = arith.mulf %868, %869 : vector<4x128xf32>
    %871 = arith.addf %4, %870 : vector<4x128xf32>
    %872 = vector.extract_strided_slice %1 {offsets = [0, 1], sizes = [4, 1], strides = [1, 1]} : vector<4x4xf32> to vector<4x1xf32>
    %873 = vector.extract_strided_slice %865 {offsets = [1, 0], sizes = [1, 128], strides = [1, 1]} : vector<4x128xf32> to vector<1x128xf32>
    %874 = vector.broadcast %872 : vector<4x1xf32> to vector<4x128xf32>
    %875 = vector.broadcast %873 : vector<1x128xf32> to vector<4x128xf32>
    %876 = arith.mulf %874, %875 : vector<4x128xf32>
    %877 = arith.addf %871, %876 : vector<4x128xf32>
    %878 = vector.extract_strided_slice %1 {offsets = [0, 2], sizes = [4, 1], strides = [1, 1]} : vector<4x4xf32> to vector<4x1xf32>
    %879 = vector.extract_strided_slice %865 {offsets = [2, 0], sizes = [1, 128], strides = [1, 1]} : vector<4x128xf32> to vector<1x128xf32>
    %880 = vector.broadcast %878 : vector<4x1xf32> to vector<4x128xf32>
    %881 = vector.broadcast %879 : vector<1x128xf32> to vector<4x128xf32>
    %882 = arith.mulf %880, %881 : vector<4x128xf32>
    %883 = arith.addf %877, %882 : vector<4x128xf32>
    %884 = vector.extract_strided_slice %1 {offsets = [0, 3], sizes = [4, 1], strides = [1, 1]} : vector<4x4xf32> to vector<4x1xf32>
    %885 = vector.extract_strided_slice %865 {offsets = [3, 0], sizes = [1, 128], strides = [1, 1]} : vector<4x128xf32> to vector<1x128xf32>
    %886 = vector.broadcast %884 : vector<4x1xf32> to vector<4x128xf32>
    %887 = vector.broadcast %885 : vector<1x128xf32> to vector<4x128xf32>
    %888 = arith.mulf %886, %887 : vector<4x128xf32>
    %889 = arith.addf %883, %888 : vector<4x128xf32>
    %890 = math.tanh %889 : vector<4x128xf32>
    %cst_47 = arith.constant 6.250000e-02 : f32
    %891 = vector.broadcast %cst_47 : f32 to vector<4x128xf32>
    %892 = arith.mulf %891, %890 : vector<4x128xf32>
    %893 = arith.addf %837, %892 : vector<4x128xf32>
    %894 = vector.extract_strided_slice %1 {offsets = [0, 0], sizes = [4, 1], strides = [1, 1]} : vector<4x4xf32> to vector<4x1xf32>
    %895 = vector.extract_strided_slice %893 {offsets = [0, 0], sizes = [1, 128], strides = [1, 1]} : vector<4x128xf32> to vector<1x128xf32>
    %896 = vector.broadcast %894 : vector<4x1xf32> to vector<4x128xf32>
    %897 = vector.broadcast %895 : vector<1x128xf32> to vector<4x128xf32>
    %898 = arith.mulf %896, %897 : vector<4x128xf32>
    %899 = arith.addf %4, %898 : vector<4x128xf32>
    %900 = vector.extract_strided_slice %1 {offsets = [0, 1], sizes = [4, 1], strides = [1, 1]} : vector<4x4xf32> to vector<4x1xf32>
    %901 = vector.extract_strided_slice %893 {offsets = [1, 0], sizes = [1, 128], strides = [1, 1]} : vector<4x128xf32> to vector<1x128xf32>
    %902 = vector.broadcast %900 : vector<4x1xf32> to vector<4x128xf32>
    %903 = vector.broadcast %901 : vector<1x128xf32> to vector<4x128xf32>
    %904 = arith.mulf %902, %903 : vector<4x128xf32>
    %905 = arith.addf %899, %904 : vector<4x128xf32>
    %906 = vector.extract_strided_slice %1 {offsets = [0, 2], sizes = [4, 1], strides = [1, 1]} : vector<4x4xf32> to vector<4x1xf32>
    %907 = vector.extract_strided_slice %893 {offsets = [2, 0], sizes = [1, 128], strides = [1, 1]} : vector<4x128xf32> to vector<1x128xf32>
    %908 = vector.broadcast %906 : vector<4x1xf32> to vector<4x128xf32>
    %909 = vector.broadcast %907 : vector<1x128xf32> to vector<4x128xf32>
    %910 = arith.mulf %908, %909 : vector<4x128xf32>
    %911 = arith.addf %905, %910 : vector<4x128xf32>
    %912 = vector.extract_strided_slice %1 {offsets = [0, 3], sizes = [4, 1], strides = [1, 1]} : vector<4x4xf32> to vector<4x1xf32>
    %913 = vector.extract_strided_slice %893 {offsets = [3, 0], sizes = [1, 128], strides = [1, 1]} : vector<4x128xf32> to vector<1x128xf32>
    %914 = vector.broadcast %912 : vector<4x1xf32> to vector<4x128xf32>
    %915 = vector.broadcast %913 : vector<1x128xf32> to vector<4x128xf32>
    %916 = arith.mulf %914, %915 : vector<4x128xf32>
    %917 = arith.addf %911, %916 : vector<4x128xf32>
    %918 = math.tanh %917 : vector<4x128xf32>
    %cst_48 = arith.constant 1.250000e-01 : f32
    %919 = vector.broadcast %cst_48 : f32 to vector<4x128xf32>
    %920 = arith.mulf %919, %918 : vector<4x128xf32>
    %921 = arith.addf %837, %920 : vector<4x128xf32>
    %922 = vector.extract_strided_slice %1 {offsets = [0, 0], sizes = [4, 1], strides = [1, 1]} : vector<4x4xf32> to vector<4x1xf32>
    %923 = vector.extract_strided_slice %921 {offsets = [0, 0], sizes = [1, 128], strides = [1, 1]} : vector<4x128xf32> to vector<1x128xf32>
    %924 = vector.broadcast %922 : vector<4x1xf32> to vector<4x128xf32>
    %925 = vector.broadcast %923 : vector<1x128xf32> to vector<4x128xf32>
    %926 = arith.mulf %924, %925 : vector<4x128xf32>
    %927 = arith.addf %4, %926 : vector<4x128xf32>
    %928 = vector.extract_strided_slice %1 {offsets = [0, 1], sizes = [4, 1], strides = [1, 1]} : vector<4x4xf32> to vector<4x1xf32>
    %929 = vector.extract_strided_slice %921 {offsets = [1, 0], sizes = [1, 128], strides = [1, 1]} : vector<4x128xf32> to vector<1x128xf32>
    %930 = vector.broadcast %928 : vector<4x1xf32> to vector<4x128xf32>
    %931 = vector.broadcast %929 : vector<1x128xf32> to vector<4x128xf32>
    %932 = arith.mulf %930, %931 : vector<4x128xf32>
    %933 = arith.addf %927, %932 : vector<4x128xf32>
    %934 = vector.extract_strided_slice %1 {offsets = [0, 2], sizes = [4, 1], strides = [1, 1]} : vector<4x4xf32> to vector<4x1xf32>
    %935 = vector.extract_strided_slice %921 {offsets = [2, 0], sizes = [1, 128], strides = [1, 1]} : vector<4x128xf32> to vector<1x128xf32>
    %936 = vector.broadcast %934 : vector<4x1xf32> to vector<4x128xf32>
    %937 = vector.broadcast %935 : vector<1x128xf32> to vector<4x128xf32>
    %938 = arith.mulf %936, %937 : vector<4x128xf32>
    %939 = arith.addf %933, %938 : vector<4x128xf32>
    %940 = vector.extract_strided_slice %1 {offsets = [0, 3], sizes = [4, 1], strides = [1, 1]} : vector<4x4xf32> to vector<4x1xf32>
    %941 = vector.extract_strided_slice %921 {offsets = [3, 0], sizes = [1, 128], strides = [1, 1]} : vector<4x128xf32> to vector<1x128xf32>
    %942 = vector.broadcast %940 : vector<4x1xf32> to vector<4x128xf32>
    %943 = vector.broadcast %941 : vector<1x128xf32> to vector<4x128xf32>
    %944 = arith.mulf %942, %943 : vector<4x128xf32>
    %945 = arith.addf %939, %944 : vector<4x128xf32>
    %946 = math.tanh %945 : vector<4x128xf32>
    %cst_49 = arith.constant 2.000000e+00 : f32
    %947 = vector.broadcast %cst_49 : f32 to vector<4x128xf32>
    %948 = arith.mulf %947, %890 : vector<4x128xf32>
    %949 = arith.addf %862, %948 : vector<4x128xf32>
    %cst_50 = arith.constant 2.000000e+00 : f32
    %950 = vector.broadcast %cst_50 : f32 to vector<4x128xf32>
    %951 = arith.mulf %950, %918 : vector<4x128xf32>
    %952 = arith.addf %949, %951 : vector<4x128xf32>
    %953 = arith.addf %952, %946 : vector<4x128xf32>
    %cst_51 = arith.constant 0.020833334 : f32
    %954 = vector.broadcast %cst_51 : f32 to vector<4x128xf32>
    %955 = arith.mulf %954, %953 : vector<4x128xf32>
    %956 = arith.addf %837, %955 : vector<4x128xf32>
    %c0_52 = arith.constant 0 : index
    %c0_53 = arith.constant 0 : index
    %957 = vector.load %arg4[%c0_52, %c0_53] : memref<4x128xf32, #tpu.memory_space<vmem>>, vector<4x128xf32>
    tpu.vector_store %arg4[%c0_52, %c0_53], %956 {strides = array<i32>} : memref<4x128xf32, #tpu.memory_space<vmem>>, vector<4x128xf32>,
    return
  }
  func.func @transform_0(%arg0: i32) -> (i32, i32) {
    %c0_i32 = arith.constant 0 : i32
    %c0_i32_0 = arith.constant 0 : i32
    return %c0_i32, %arg0 : i32, i32
  }
  func.func @transform_1(%arg0: i32) -> (i32, i32) {
    %c0_i32 = arith.constant 0 : i32
    %c0_i32_0 = arith.constant 0 : i32
    %c0_i32_1 = arith.constant 0 : i32
    return %c0_i32, %c0_i32_0 : i32, i32
  }
  func.func @transform_2(%arg0: i32) -> (i32, i32) {
    %c0_i32 = arith.constant 0 : i32
    %c0_i32_0 = arith.constant 0 : i32
    %c0_i32_1 = arith.constant 0 : i32
    return %c0_i32, %c0_i32_0 : i32, i32
  }
  func.func @transform_3(%arg0: i32) -> (i32, i32) {
    %c0_i32 = arith.constant 0 : i32
    %c0_i32_0 = arith.constant 0 : i32
    return %c0_i32, %arg0 : i32, i32
  }
}

</mosaic_0001>

<llo_original>
// kernel: tpu_custom_call.1
$region0: #{tpu_custom_call.1}
  #allocation0 [shape = 'u32[]', space=smem, size = 0x4, offset = 0x4, fixed_abs, tag = 'smem constant byte address 0x4 - core index']
  #allocation1 [shape = 'u32[144,128]{1,0:T(1,128)}', space=vmem, size = 0x12000, scoped, tag = 'internal scratch']
  %s0 = inlined_call_operand.hbm [shape: f32[4,256], index: 0, kind: input, shape index: {}]
  %s1 = inlined_call_operand.vmem [shape: f32[4,4], index: 1, kind: input, shape index: {}]
  %s2 = inlined_call_operand.vmem [shape: f32[4,1], index: 2, kind: input, shape index: {}]
  %s3 = inlined_call_operand.hbm [shape: f32[4,256], index: 3, kind: output, shape index: {}]
  %s4 = sld [smem:[#allocation0]]
  $region49: #{tpu_custom_call.1} parent=0
    _
  %s6 = ssub.s32 1, %s4
  %s7 = scalar_select 0, %s6, %s4
  $region1: #{tpu_custom_call.1} parent=0
    #allocation2 [shape = 'u8[4096]{0}', space=vmem, size = 0x1000, scoped, tag = 'input window, operand 0']
    #allocation3 [shape = 's32[2]{0}', space=sflag, size = 0x8, scoped, tag = 'scoped memory for tpu_custom_call.1']
    #allocation4 [shape = 's32[2]{0}', space=sflag, size = 0x8, scoped, tag = 'scoped memory for tpu_custom_call.1']
    #allocation5 [shape = 'u8[4096]{0}', space=vmem, size = 0x1000, scoped, tag = 'output window, operand 0']
    %8 = vsyncpa [#allocation3], 0
    %s9 = scalar_lea.sflag [#allocation3], 1
    %10 = vsyncpa %s9, 0
    %11 = vsyncpa [#allocation4], 0
    %s12 = scalar_lea.sflag [#allocation4], 1
    %13 = vsyncpa %s12, 0
    loop: start=0, step=1, limit=4
    $region2: #{tpu_custom_call.1} parent=1 // loop_pre_header
      _
    $region3: #{tpu_custom_call.1} parent=1 // loop_header
      %s15 = sphi 0, %s19
      %p16 = scmp.ge.s32.totalorder %s15, 4
      %s25 = sphi 0, %s27
      %s28 = sphi 0, %s25
      %s29 = sphi 0, %s28
      %s45 = sphi 0, %s29
      %s49 = sphi 0, %s49
      %s51 = sphi 0, %s49
      %s52 = sphi 0, %s51
      %s66 = sphi 0, %s52
      %s70 = sphi 0, %s70
      %s72 = sphi 0, %s70
      %s73 = sphi 0, %s72
      %s87 = sphi 0, %s73
      %s93 = sphi 0, %s95
      %s96 = sphi 0, %s93
      %s97 = sphi 0, %s96
      %s113 = sphi 0, %s97
    $region4: #{tpu_custom_call.1} parent=1 // loop_header_branch
      %18 = sbr.rel (%p16) target = $region8
    $region5: #{tpu_custom_call.1} parent=1 // loop_body
      %s20 = ssub.s32 %s15, 1
      %s21 = ssub.s32 %s15, 2
      %s22 = sadd.s32 %s15, 1
      %s23 = ssub.s32 %s15, %s22
      %p24 = scmp.eq.s32.totalorder %s23, 0
      %s26 = sadd.s32 %s25, 1
      %s27 = scalar_select %p24, %s25, %s26
      %p30 = pneg %p24
      %p31 = scmp.eq.s32.totalorder %s15, 1
      %p32 = por %p30, %p31
      %p33 = scmp.ne.s32.totalorder %s25, %s28
      %p34 = scmp.eq.s32.totalorder %s15, 0
      %p35 = por %p33, %p34
      %p36 = scmp.ne.s32.totalorder %s25, %s28
      %p37 = scmp.eq.s32.totalorder %s20, 1
      %p38 = por %p36, %p37
      %p39 = scmp.ne.s32.totalorder %s28, %s29
      %p40 = scmp.eq.s32.totalorder %s20, 0
      %p41 = por %p39, %p40
      %p42 = scmp.ne.s32.totalorder %s28, %s29
      %p43 = scmp.eq.s32.totalorder %s21, 1
      %p44 = por %p42, %p43
      %p46 = scmp.ne.s32.totalorder %s29, %s45
      %p47 = scmp.eq.s32.totalorder %s21, 0
      %p48 = por %p46, %p47
      %s50 = sadd.s32 %s49, 1
      %p53 = scmp.eq.s32.totalorder %s15, 1
      %p54 = scmp.ne.s32.totalorder %s49, %s51
      %p55 = scmp.eq.s32.totalorder %s15, 0
      %p56 = por %p54, %p55
      %p57 = scmp.ne.s32.totalorder %s49, %s51
      %p58 = scmp.eq.s32.totalorder %s20, 1
      %p59 = por %p57, %p58
      %p60 = scmp.ne.s32.totalorder %s51, %s52
      %p61 = scmp.eq.s32.totalorder %s20, 0
      %p62 = por %p60, %p61
      %p63 = scmp.ne.s32.totalorder %s51, %s52
      %p64 = scmp.eq.s32.totalorder %s21, 1
      %p65 = por %p63, %p64
      %p67 = scmp.ne.s32.totalorder %s52, %s66
      %p68 = scmp.eq.s32.totalorder %s21, 0
      %p69 = por %p67, %p68
      %s71 = sadd.s32 %s70, 1
      %p74 = scmp.eq.s32.totalorder %s15, 1
      %p75 = scmp.ne.s32.totalorder %s70, %s72
      %p76 = scmp.eq.s32.totalorder %s15, 0
      %p77 = por %p75, %p76
      %p78 = scmp.ne.s32.totalorder %s70, %s72
      %p79 = scmp.eq.s32.totalorder %s20, 1
      %p80 = por %p78, %p79
      %p81 = scmp.ne.s32.totalorder %s72, %s73
      %p82 = scmp.eq.s32.totalorder %s20, 0
      %p83 = por %p81, %p82
      %p84 = scmp.ne.s32.totalorder %s72, %s73
      %p85 = scmp.eq.s32.totalorder %s21, 1
      %p86 = por %p84, %p85
      %p88 = scmp.ne.s32.totalorder %s73, %s87
      %p89 = scmp.eq.s32.totalorder %s21, 0
      %p90 = por %p88, %p89
      %s91 = ssub.s32 %s15, %s22
      %p92 = scmp.eq.s32.totalorder %s91, 0
      %s94 = sadd.s32 %s93, 1
      %s95 = scalar_select %p92, %s93, %s94
      %p98 = pneg %p92
      %p99 = scmp.eq.s32.totalorder %s15, 1
      %p100 = por %p98, %p99
      %p101 = scmp.ne.s32.totalorder %s93, %s96
      %p102 = scmp.eq.s32.totalorder %s15, 0
      %p103 = por %p101, %p102
      %p104 = scmp.ne.s32.totalorder %s93, %s96
      %p105 = scmp.eq.s32.totalorder %s20, 1
      %p106 = por %p104, %p105
      %p107 = scmp.ne.s32.totalorder %s96, %s97
      %p108 = scmp.eq.s32.totalorder %s20, 0
      %p109 = por %p107, %p108
      %p110 = scmp.ne.s32.totalorder %s96, %s97
      %p111 = scmp.eq.s32.totalorder %s21, 1
      %p112 = por %p110, %p111
      %p114 = scmp.ne.s32.totalorder %s97, %s113
      %p115 = scmp.eq.s32.totalorder %s21, 0
      %p116 = por %p114, %p115
      %p117 = scmp.le.s32.totalorder 1, %s15
      %p118 = scmp.lt.s32.totalorder %s15, 3
      %p119 = pnand %p117, %p118
      %p120 = pneg %p119
      // Predicated region
      $region9: #{tpu_custom_call.1} parent=5 // pred_check
        _
      $region10: #{tpu_custom_call.1} parent=5 // pred_check_branch
        %122 = sbr.rel (%p119) target = $region12
      $region11: #{tpu_custom_call.1} parent=5 // pred_region
        %s123 = ssub.s32 %s15, 1
        // Predicated region
        $region13: #{tpu_custom_call.1} parent=11 // pred_check
          %p124 = pneg %p62
        $region14: #{tpu_custom_call.1} parent=11 // pred_check_branch
          %126 = sbr.rel (%p124) target = $region16
        $region15: #{tpu_custom_call.1} parent=11 // pred_region
          _
        $region16: #{tpu_custom_call.1} parent=11 // pred_fallthru
          _
        // Predicated region
        $region17: #{tpu_custom_call.1} parent=11 // pred_check
          %p127 = pneg %p83
        $region18: #{tpu_custom_call.1} parent=11 // pred_check_branch
          %129 = sbr.rel (%p127) target = $region20
        $region19: #{tpu_custom_call.1} parent=11 // pred_region
          _
        $region20: #{tpu_custom_call.1} parent=11 // pred_fallthru
          _
      $region12: #{tpu_custom_call.1} parent=5 // pred_fallthru
        _
      %p130 = scmp.lt.s32.totalorder %s15, 2
      // Predicated region
      $region21: #{tpu_custom_call.1} parent=5 // pred_check
        %p131 = pneg %p130
      $region22: #{tpu_custom_call.1} parent=5 // pred_check_branch
        %133 = sbr.rel (%p131) target = $region24
      $region23: #{tpu_custom_call.1} parent=5 // pred_region
        // Predicated region
        $region25: #{tpu_custom_call.1} parent=23 // pred_check
          %p134 = pneg %p35
        $region26: #{tpu_custom_call.1} parent=23 // pred_check_branch
          %136 = sbr.rel (%p134) target = $region28
        $region27: #{tpu_custom_call.1} parent=23 // pred_region
          %s137 = sand.u32 %s25, 1
          %s138 = scalar_lea.sflag [#allocation3], %s137
          %s139 = sand.u32 %s25, 1
          %s140 = smul.addr %s139, 4
          %s141 = scalar_lea.vmem [#allocation2], %s140
          %s143 = ssub.s32 64, 64
          %144 = vsyncadd %s138, %s143
          %s145 = smul.addr %s15, 64
          %s146 = scalar_lea.hbm %s0, %s145
          %s148 = sshll.u32 %s141, 4
          %s149 = int_to_ptr.vmem [resolvable:$true] %s148
          %151 = dma.hbm_to_vmem [thread:$0]  %s146, 64, %s149, %s138
        $region28: #{tpu_custom_call.1} parent=23 // pred_fallthru
          _
      $region24: #{tpu_custom_call.1} parent=5 // pred_fallthru
        _
      %p152 = scmp.le.s32.totalorder 1, %s15
      %p153 = scmp.lt.s32.totalorder %s15, 3
      %p154 = pnand %p152, %p153
      %p155 = pneg %p154
      // Predicated region
      $region29: #{tpu_custom_call.1} parent=5 // pred_check
        _
      $region30: #{tpu_custom_call.1} parent=5 // pred_check_branch
        %157 = sbr.rel (%p154) target = $region32
      $region31: #{tpu_custom_call.1} parent=5 // pred_region
        %s158 = ssub.s32 %s15, 1
        %s159 = sand.u32 %s28, 1
        %s160 = scalar_lea.sflag [#allocation3], %s159
        %s161 = sand.u32 %s28, 1
        %s162 = smul.addr %s161, 4
        %s163 = scalar_lea.vmem [#allocation2], %s162
        // Predicated region
        $region33: #{tpu_custom_call.1} parent=31 // pred_check
          %p164 = pneg %p41
        $region34: #{tpu_custom_call.1} parent=31 // pred_check_branch
          %166 = sbr.rel (%p164) target = $region36
        $region35: #{tpu_custom_call.1} parent=31 // pred_region
          %167 = dma.done %s160, 64
        $region36: #{tpu_custom_call.1} parent=31 // pred_fallthru
          _
        %s168 = sand.u32 %s28, 1
        %s169 = scalar_lea.sflag [#allocation3], %s168
        %s170 = sand.u32 %s28, 1
        %s171 = smul.addr %s170, 4
        %s172 = scalar_lea.vmem [#allocation2], %s171
        %p173 = pneg %p41
        %p174 = pneg %p38
        %p175 = pneg %p62
        %p176 = pneg %p59
        %p177 = pneg %p83
        %p178 = pneg %p80
        %p179 = pneg %p109
        %p180 = pneg %p106
        %s181 = sand.u32 %s96, 1
        %s182 = scalar_lea.sflag [#allocation4], %s181
        %s183 = sand.u32 %s96, 1
        %s184 = smul.addr %s183, 4
        %s185 = scalar_lea.vmem [#allocation5], %s184
        %v186 = vld [vmem:[%s163] sm:$0xf]
        %v187 = vld [vmem:[%s1] sm:$0xf]
        %v188 = vld [vmem:[%s2] sm:$0xf]
        %190 = vset.pattern.permute.xlu0 0
        %191 = vperm.xlu0 %190, %v188
        %v192 = vpop.permute.xlu0 %191
        %195 = vset.pattern.permute.xlu0 0
        %196 = vperm.xlu0 %195, %v187
        %v197 = vpop.permute.xlu0 %196
        %v199 = vlaneseq
        %v200 = vshrl.u32 %v199, 7
        %v201 = vsub.s32 0, %v200
        %v202 = vrot.slane %v186, %v201
        %v203 = vmul.f32 %v197, %v202
        %v204 = vadd.f32 %v192, %v203
        %205 = vset.pattern.permute.xlu0 1
        %206 = vperm.xlu0 %205, %v187
        %v207 = vpop.permute.xlu0 %206
        %v209 = vlaneseq
        %v210 = vshrl.u32 %v209, 7
        %v211 = vsub.s32 1, %v210
        %v212 = vrot.slane %v186, %v211
        %v213 = vmul.f32 %v207, %v212
        %v214 = vadd.f32 %v204, %v213
        %215 = vset.pattern.permute.xlu0 2
        %216 = vperm.xlu0 %215, %v187
        %v217 = vpop.permute.xlu0 %216
        %v219 = vlaneseq
        %v220 = vshrl.u32 %v219, 7
        %v221 = vsub.s32 2, %v220
        %v222 = vrot.slane %v186, %v221
        %v223 = vmul.f32 %v217, %v222
        %v224 = vadd.f32 %v214, %v223
        %225 = vset.pattern.permute.xlu0 3
        %226 = vperm.xlu0 %225, %v187
        %v227 = vpop.permute.xlu0 %226
        %v229 = vlaneseq
        %v230 = vshrl.u32 %v229, 7
        %v231 = vsub.s32 3, %v230
        %v232 = vrot.slane %v186, %v231
        %v233 = vmul.f32 %v227, %v232
        %v234 = vadd.f32 %v224, %v233
        %v235 = vtanh.pop %v234
        %v236 = vmul.f32 %v235, 0.0625
        %v237 = vadd.f32 %v186, %v236
        %v238 = vlaneseq
        %v239 = vshrl.u32 %v238, 7
        %v240 = vsub.s32 0, %v239
        %v241 = vrot.slane %v237, %v240
        %v242 = vmul.f32 %v197, %v241
        %v243 = vadd.f32 %v192, %v242
        %v244 = vlaneseq
        %v245 = vshrl.u32 %v244, 7
        %v246 = vsub.s32 1, %v245
        %v247 = vrot.slane %v237, %v246
        %v248 = vmul.f32 %v207, %v247
        %v249 = vadd.f32 %v243, %v248
        %v250 = vlaneseq
        %v251 = vshrl.u32 %v250, 7
        %v252 = vsub.s32 2, %v251
        %v253 = vrot.slane %v237, %v252
        %v254 = vmul.f32 %v217, %v253
        %v255 = vadd.f32 %v249, %v254
        %v256 = vlaneseq
        %v257 = vshrl.u32 %v256, 7
        %v258 = vsub.s32 3, %v257
        %v259 = vrot.slane %v237, %v258
        %v260 = vmul.f32 %v227, %v259
        %v261 = vadd.f32 %v255, %v260
        %v262 = vtanh.pop %v261
        %v263 = vmul.f32 %v262, 0.0625
        %v264 = vadd.f32 %v186, %v263
        %v265 = vlaneseq
        %v266 = vshrl.u32 %v265, 7
        %v267 = vsub.s32 0, %v266
        %v268 = vrot.slane %v264, %v267
        %v269 = vmul.f32 %v197, %v268
        %v270 = vadd.f32 %v192, %v269
        %v271 = vlaneseq
        %v272 = vshrl.u32 %v271, 7
        %v273 = vsub.s32 1, %v272
        %v274 = vrot.slane %v264, %v273
        %v275 = vmul.f32 %v207, %v274
        %v276 = vadd.f32 %v270, %v275
        %v277 = vlaneseq
        %v278 = vshrl.u32 %v277, 7
        %v279 = vsub.s32 2, %v278
        %v280 = vrot.slane %v264, %v279
        %v281 = vmul.f32 %v217, %v280
        %v282 = vadd.f32 %v276, %v281
        %v283 = vlaneseq
        %v284 = vshrl.u32 %v283, 7
        %v285 = vsub.s32 3, %v284
        %v286 = vrot.slane %v264, %v285
        %v287 = vmul.f32 %v227, %v286
        %v288 = vadd.f32 %v282, %v287
        %v289 = vtanh.pop %v288
        %v290 = vmul.f32 %v289, 0.125
        %v291 = vadd.f32 %v186, %v290
        %v292 = vlaneseq
        %v293 = vshrl.u32 %v292, 7
        %v294 = vsub.s32 0, %v293
        %v295 = vrot.slane %v291, %v294
        %v296 = vmul.f32 %v197, %v295
        %v297 = vadd.f32 %v192, %v296
        %v298 = vlaneseq
        %v299 = vshrl.u32 %v298, 7
        %v300 = vsub.s32 1, %v299
        %v301 = vrot.slane %v291, %v300
        %v302 = vmul.f32 %v207, %v301
        %v303 = vadd.f32 %v297, %v302
        %v304 = vlaneseq
        %v305 = vshrl.u32 %v304, 7
        %v306 = vsub.s32 2, %v305
        %v307 = vrot.slane %v291, %v306
        %v308 = vmul.f32 %v217, %v307
        %v309 = vadd.f32 %v303, %v308
        %v310 = vlaneseq
        %v311 = vshrl.u32 %v310, 7
        %v312 = vsub.s32 3, %v311
        %v313 = vrot.slane %v291, %v312
        %v314 = vmul.f32 %v227, %v313
        %v315 = vadd.f32 %v309, %v314
        %v316 = vtanh.pop %v315
        %v317 = vmul.f32 %v262, 2.0
        %v318 = vadd.f32 %v235, %v317
        %v319 = vmul.f32 %v289, 2.0
        %v320 = vadd.f32 %v318, %v319
        %v321 = vadd.f32 %v320, %v316
        %v322 = vmul.f32 %v321, 0.020833334
        %v323 = vadd.f32 %v186, %v322
        %v324 = vlaneseq
        %v325 = vshrl.u32 %v324, 7
        %v326 = vsub.s32 0, %v325
        %v327 = vrot.slane %v323, %v326
        %v328 = vmul.f32 %v197, %v327
        %v329 = vadd.f32 %v192, %v328
        %v330 = vlaneseq
        %v331 = vshrl.u32 %v330, 7
        %v332 = vsub.s32 1, %v331
        %v333 = vrot.slane %v323, %v332
        %v334 = vmul.f32 %v207, %v333
        %v335 = vadd.f32 %v329, %v334
        %v336 = vlaneseq
        %v337 = vshrl.u32 %v336, 7
        %v338 = vsub.s32 2, %v337
        %v339 = vrot.slane %v323, %v338
        %v340 = vmul.f32 %v217, %v339
        %v341 = vadd.f32 %v335, %v340
        %v342 = vlaneseq
        %v343 = vshrl.u32 %v342, 7
        %v344 = vsub.s32 3, %v343
        %v345 = vrot.slane %v323, %v344
        %v346 = vmul.f32 %v227, %v345
        %v347 = vadd.f32 %v341, %v346
        %v348 = vtanh.pop %v347
        %v349 = vmul.f32 %v348, 0.0625
        %v350 = vadd.f32 %v323, %v349
        %v351 = vlaneseq
        %v352 = vshrl.u32 %v351, 7
        %v353 = vsub.s32 0, %v352
        %v354 = vrot.slane %v350, %v353
        %v355 = vmul.f32 %v197, %v354
        %v356 = vadd.f32 %v192, %v355
        %v357 = vlaneseq
        %v358 = vshrl.u32 %v357, 7
        %v359 = vsub.s32 1, %v358
        %v360 = vrot.slane %v350, %v359
        %v361 = vmul.f32 %v207, %v360
        %v362 = vadd.f32 %v356, %v361
        %v363 = vlaneseq
        %v364 = vshrl.u32 %v363, 7
        %v365 = vsub.s32 2, %v364
        %v366 = vrot.slane %v350, %v365
        %v367 = vmul.f32 %v217, %v366
        %v368 = vadd.f32 %v362, %v367
        %v369 = vlaneseq
        %v370 = vshrl.u32 %v369, 7
        %v371 = vsub.s32 3, %v370
        %v372 = vrot.slane %v350, %v371
        %v373 = vmul.f32 %v227, %v372
        %v374 = vadd.f32 %v368, %v373
        %v375 = vtanh.pop %v374
        %v376 = vmul.f32 %v375, 0.0625
        %v377 = vadd.f32 %v323, %v376
        %v378 = vlaneseq
        %v379 = vshrl.u32 %v378, 7
        %v380 = vsub.s32 0, %v379
        %v381 = vrot.slane %v377, %v380
        %v382 = vmul.f32 %v197, %v381
        %v383 = vadd.f32 %v192, %v382
        %v384 = vlaneseq
        %v385 = vshrl.u32 %v384, 7
        %v386 = vsub.s32 1, %v385
        %v387 = vrot.slane %v377, %v386
        %v388 = vmul.f32 %v207, %v387
        %v389 = vadd.f32 %v383, %v388
        %v390 = vlaneseq
        %v391 = vshrl.u32 %v390, 7
        %v392 = vsub.s32 2, %v391
        %v393 = vrot.slane %v377, %v392
        %v394 = vmul.f32 %v217, %v393
        %v395 = vadd.f32 %v389, %v394
        %v396 = vlaneseq
        %v397 = vshrl.u32 %v396, 7
        %v398 = vsub.s32 3, %v397
        %v399 = vrot.slane %v377, %v398
        %v400 = vmul.f32 %v227, %v399
        %v401 = vadd.f32 %v395, %v400
        %v402 = vtanh.pop %v401
        %v403 = vmul.f32 %v402, 0.125
        %v404 = vadd.f32 %v323, %v403
        %v405 = vlaneseq
        %v406 = vshrl.u32 %v405, 7
        %v407 = vsub.s32 0, %v406
        %v408 = vrot.slane %v404, %v407
        %v409 = vmul.f32 %v197, %v408
        %v410 = vadd.f32 %v192, %v409
        %v411 = vlaneseq
        %v412 = vshrl.u32 %v411, 7
        %v413 = vsub.s32 1, %v412
        %v414 = vrot.slane %v404, %v413
        %v415 = vmul.f32 %v207, %v414
        %v416 = vadd.f32 %v410, %v415
        %v417 = vlaneseq
        %v418 = vshrl.u32 %v417, 7
        %v419 = vsub.s32 2, %v418
        %v420 = vrot.slane %v404, %v419
        %v421 = vmul.f32 %v217, %v420
        %v422 = vadd.f32 %v416, %v421
        %v423 = vlaneseq
        %v424 = vshrl.u32 %v423, 7
        %v425 = vsub.s32 3, %v424
        %v426 = vrot.slane %v404, %v425
        %v427 = vmul.f32 %v227, %v426
        %v428 = vadd.f32 %v422, %v427
        %v429 = vtanh.pop %v428
        %v430 = vmul.f32 %v375, 2.0
        %v431 = vadd.f32 %v348, %v430
        %v432 = vmul.f32 %v402, 2.0
        %v433 = vadd.f32 %v431, %v432
        %v434 = vadd.f32 %v433, %v429
        %v435 = vmul.f32 %v434, 0.020833334
        %v436 = vadd.f32 %v323, %v435
        %v437 = vlaneseq
        %v438 = vshrl.u32 %v437, 7
        %v439 = vsub.s32 0, %v438
        %v440 = vrot.slane %v436, %v439
        %v441 = vmul.f32 %v197, %v440
        %v442 = vadd.f32 %v192, %v441
        %v443 = vlaneseq
        %v444 = vshrl.u32 %v443, 7
        %v445 = vsub.s32 1, %v444
        %v446 = vrot.slane %v436, %v445
        %v447 = vmul.f32 %v207, %v446
        %v448 = vadd.f32 %v442, %v447
        %v449 = vlaneseq
        %v450 = vshrl.u32 %v449, 7
        %v451 = vsub.s32 2, %v450
        %v452 = vrot.slane %v436, %v451
        %v453 = vmul.f32 %v217, %v452
        %v454 = vadd.f32 %v448, %v453
        %v455 = vlaneseq
        %v456 = vshrl.u32 %v455, 7
        %v457 = vsub.s32 3, %v456
        %v458 = vrot.slane %v436, %v457
        %v459 = vmul.f32 %v227, %v458
        %v460 = vadd.f32 %v454, %v459
        %v461 = vtanh.pop %v460
        %v462 = vmul.f32 %v461, 0.0625
        %v463 = vadd.f32 %v436, %v462
        %v464 = vlaneseq
        %v465 = vshrl.u32 %v464, 7
        %v466 = vsub.s32 0, %v465
        %v467 = vrot.slane %v463, %v466
        %v468 = vmul.f32 %v197, %v467
        %v469 = vadd.f32 %v192, %v468
        %v470 = vlaneseq
        %v471 = vshrl.u32 %v470, 7
        %v472 = vsub.s32 1, %v471
        %v473 = vrot.slane %v463, %v472
        %v474 = vmul.f32 %v207, %v473
        %v475 = vadd.f32 %v469, %v474
        %v476 = vlaneseq
        %v477 = vshrl.u32 %v476, 7
        %v478 = vsub.s32 2, %v477
        %v479 = vrot.slane %v463, %v478
        %v480 = vmul.f32 %v217, %v479
        %v481 = vadd.f32 %v475, %v480
        %v482 = vlaneseq
        %v483 = vshrl.u32 %v482, 7
        %v484 = vsub.s32 3, %v483
        %v485 = vrot.slane %v463, %v484
        %v486 = vmul.f32 %v227, %v485
        %v487 = vadd.f32 %v481, %v486
        %v488 = vtanh.pop %v487
        %v489 = vmul.f32 %v488, 0.0625
        %v490 = vadd.f32 %v436, %v489
        %v491 = vlaneseq
        %v492 = vshrl.u32 %v491, 7
        %v493 = vsub.s32 0, %v492
        %v494 = vrot.slane %v490, %v493
        %v495 = vmul.f32 %v197, %v494
        %v496 = vadd.f32 %v192, %v495
        %v497 = vlaneseq
        %v498 = vshrl.u32 %v497, 7
        %v499 = vsub.s32 1, %v498
        %v500 = vrot.slane %v490, %v499
        %v501 = vmul.f32 %v207, %v500
        %v502 = vadd.f32 %v496, %v501
        %v503 = vlaneseq
        %v504 = vshrl.u32 %v503, 7
        %v505 = vsub.s32 2, %v504
        %v506 = vrot.slane %v490, %v505
        %v507 = vmul.f32 %v217, %v506
        %v508 = vadd.f32 %v502, %v507
        %v509 = vlaneseq
        %v510 = vshrl.u32 %v509, 7
        %v511 = vsub.s32 3, %v510
        %v512 = vrot.slane %v490, %v511
        %v513 = vmul.f32 %v227, %v512
        %v514 = vadd.f32 %v508, %v513
        %v515 = vtanh.pop %v514
        %v516 = vmul.f32 %v515, 0.125
        %v517 = vadd.f32 %v436, %v516
        %v518 = vlaneseq
        %v519 = vshrl.u32 %v518, 7
        %v520 = vsub.s32 0, %v519
        %v521 = vrot.slane %v517, %v520
        %v522 = vmul.f32 %v197, %v521
        %v523 = vadd.f32 %v192, %v522
        %v524 = vlaneseq
        %v525 = vshrl.u32 %v524, 7
        %v526 = vsub.s32 1, %v525
        %v527 = vrot.slane %v517, %v526
        %v528 = vmul.f32 %v207, %v527
        %v529 = vadd.f32 %v523, %v528
        %v530 = vlaneseq
        %v531 = vshrl.u32 %v530, 7
        %v532 = vsub.s32 2, %v531
        %v533 = vrot.slane %v517, %v532
        %v534 = vmul.f32 %v217, %v533
        %v535 = vadd.f32 %v529, %v534
        %v536 = vlaneseq
        %v537 = vshrl.u32 %v536, 7
        %v538 = vsub.s32 3, %v537
        %v539 = vrot.slane %v517, %v538
        %v540 = vmul.f32 %v227, %v539
        %v541 = vadd.f32 %v535, %v540
        %v542 = vtanh.pop %v541
        %v543 = vmul.f32 %v488, 2.0
        %v544 = vadd.f32 %v461, %v543
        %v545 = vmul.f32 %v515, 2.0
        %v546 = vadd.f32 %v544, %v545
        %v547 = vadd.f32 %v546, %v542
        %v548 = vmul.f32 %v547, 0.020833334
        %v549 = vadd.f32 %v436, %v548
        %v550 = vlaneseq
        %v551 = vshrl.u32 %v550, 7
        %v552 = vsub.s32 0, %v551
        %v553 = vrot.slane %v549, %v552
        %v554 = vmul.f32 %v197, %v553
        %v555 = vadd.f32 %v192, %v554
        %v556 = vlaneseq
        %v557 = vshrl.u32 %v556, 7
        %v558 = vsub.s32 1, %v557
        %v559 = vrot.slane %v549, %v558
        %v560 = vmul.f32 %v207, %v559
        %v561 = vadd.f32 %v555, %v560
        %v562 = vlaneseq
        %v563 = vshrl.u32 %v562, 7
        %v564 = vsub.s32 2, %v563
        %v565 = vrot.slane %v549, %v564
        %v566 = vmul.f32 %v217, %v565
        %v567 = vadd.f32 %v561, %v566
        %v568 = vlaneseq
        %v569 = vshrl.u32 %v568, 7
        %v570 = vsub.s32 3, %v569
        %v571 = vrot.slane %v549, %v570
        %v572 = vmul.f32 %v227, %v571
        %v573 = vadd.f32 %v567, %v572
        %v574 = vtanh.pop %v573
        %v575 = vmul.f32 %v574, 0.0625
        %v576 = vadd.f32 %v549, %v575
        %v577 = vlaneseq
        %v578 = vshrl.u32 %v577, 7
        %v579 = vsub.s32 0, %v578
        %v580 = vrot.slane %v576, %v579
        %v581 = vmul.f32 %v197, %v580
        %v582 = vadd.f32 %v192, %v581
        %v583 = vlaneseq
        %v584 = vshrl.u32 %v583, 7
        %v585 = vsub.s32 1, %v584
        %v586 = vrot.slane %v576, %v585
        %v587 = vmul.f32 %v207, %v586
        %v588 = vadd.f32 %v582, %v587
        %v589 = vlaneseq
        %v590 = vshrl.u32 %v589, 7
        %v591 = vsub.s32 2, %v590
        %v592 = vrot.slane %v576, %v591
        %v593 = vmul.f32 %v217, %v592
        %v594 = vadd.f32 %v588, %v593
        %v595 = vlaneseq
        %v596 = vshrl.u32 %v595, 7
        %v597 = vsub.s32 3, %v596
        %v598 = vrot.slane %v576, %v597
        %v599 = vmul.f32 %v227, %v598
        %v600 = vadd.f32 %v594, %v599
        %v601 = vtanh.pop %v600
        %v602 = vmul.f32 %v601, 0.0625
        %v603 = vadd.f32 %v549, %v602
        %v604 = vlaneseq
        %v605 = vshrl.u32 %v604, 7
        %v606 = vsub.s32 0, %v605
        %v607 = vrot.slane %v603, %v606
        %v608 = vmul.f32 %v197, %v607
        %v609 = vadd.f32 %v192, %v608
        %v610 = vlaneseq
        %v611 = vshrl.u32 %v610, 7
        %v612 = vsub.s32 1, %v611
        %v613 = vrot.slane %v603, %v612
        %v614 = vmul.f32 %v207, %v613
        %v615 = vadd.f32 %v609, %v614
        %v616 = vlaneseq
        %v617 = vshrl.u32 %v616, 7
        %v618 = vsub.s32 2, %v617
        %v619 = vrot.slane %v603, %v618
        %v620 = vmul.f32 %v217, %v619
        %v621 = vadd.f32 %v615, %v620
        %v622 = vlaneseq
        %v623 = vshrl.u32 %v622, 7
        %v624 = vsub.s32 3, %v623
        %v625 = vrot.slane %v603, %v624
        %v626 = vmul.f32 %v227, %v625
        %v627 = vadd.f32 %v621, %v626
        %v628 = vtanh.pop %v627
        %v629 = vmul.f32 %v628, 0.125
        %v630 = vadd.f32 %v549, %v629
        %v631 = vlaneseq
        %v632 = vshrl.u32 %v631, 7
        %v633 = vsub.s32 0, %v632
        %v634 = vrot.slane %v630, %v633
        %v635 = vmul.f32 %v197, %v634
        %v636 = vadd.f32 %v192, %v635
        %v637 = vlaneseq
        %v638 = vshrl.u32 %v637, 7
        %v639 = vsub.s32 1, %v638
        %v640 = vrot.slane %v630, %v639
        %v641 = vmul.f32 %v207, %v640
        %v642 = vadd.f32 %v636, %v641
        %v643 = vlaneseq
        %v644 = vshrl.u32 %v643, 7
        %v645 = vsub.s32 2, %v644
        %v646 = vrot.slane %v630, %v645
        %v647 = vmul.f32 %v217, %v646
        %v648 = vadd.f32 %v642, %v647
        %v649 = vlaneseq
        %v650 = vshrl.u32 %v649, 7
        %v651 = vsub.s32 3, %v650
        %v652 = vrot.slane %v630, %v651
        %v653 = vmul.f32 %v227, %v652
        %v654 = vadd.f32 %v648, %v653
        %v655 = vtanh.pop %v654
        %v656 = vmul.f32 %v601, 2.0
        %v657 = vadd.f32 %v574, %v656
        %v658 = vmul.f32 %v628, 2.0
        %v659 = vadd.f32 %v657, %v658
        %v660 = vadd.f32 %v659, %v655
        %v661 = vmul.f32 %v660, 0.020833334
        %v662 = vadd.f32 %v549, %v661
        %v663 = vlaneseq
        %v664 = vshrl.u32 %v663, 7
        %v665 = vsub.s32 0, %v664
        %v666 = vrot.slane %v662, %v665
        %v667 = vmul.f32 %v197, %v666
        %v668 = vadd.f32 %v192, %v667
        %v669 = vlaneseq
        %v670 = vshrl.u32 %v669, 7
        %v671 = vsub.s32 1, %v670
        %v672 = vrot.slane %v662, %v671
        %v673 = vmul.f32 %v207, %v672
        %v674 = vadd.f32 %v668, %v673
        %v675 = vlaneseq
        %v676 = vshrl.u32 %v675, 7
        %v677 = vsub.s32 2, %v676
        %v678 = vrot.slane %v662, %v677
        %v679 = vmul.f32 %v217, %v678
        %v680 = vadd.f32 %v674, %v679
        %v681 = vlaneseq
        %v682 = vshrl.u32 %v681, 7
        %v683 = vsub.s32 3, %v682
        %v684 = vrot.slane %v662, %v683
        %v685 = vmul.f32 %v227, %v684
        %v686 = vadd.f32 %v680, %v685
        %v687 = vtanh.pop %v686
        %v688 = vmul.f32 %v687, 0.0625
        %v689 = vadd.f32 %v662, %v688
        %v690 = vlaneseq
        %v691 = vshrl.u32 %v690, 7
        %v692 = vsub.s32 0, %v691
        %v693 = vrot.slane %v689, %v692
        %v694 = vmul.f32 %v197, %v693
        %v695 = vadd.f32 %v192, %v694
        %v696 = vlaneseq
        %v697 = vshrl.u32 %v696, 7
        %v698 = vsub.s32 1, %v697
        %v699 = vrot.slane %v689, %v698
        %v700 = vmul.f32 %v207, %v699
        %v701 = vadd.f32 %v695, %v700
        %v702 = vlaneseq
        %v703 = vshrl.u32 %v702, 7
        %v704 = vsub.s32 2, %v703
        %v705 = vrot.slane %v689, %v704
        %v706 = vmul.f32 %v217, %v705
        %v707 = vadd.f32 %v701, %v706
        %v708 = vlaneseq
        %v709 = vshrl.u32 %v708, 7
        %v710 = vsub.s32 3, %v709
        %v711 = vrot.slane %v689, %v710
        %v712 = vmul.f32 %v227, %v711
        %v713 = vadd.f32 %v707, %v712
        %v714 = vtanh.pop %v713
        %v715 = vmul.f32 %v714, 0.0625
        %v716 = vadd.f32 %v662, %v715
        %v717 = vlaneseq
        %v718 = vshrl.u32 %v717, 7
        %v719 = vsub.s32 0, %v718
        %v720 = vrot.slane %v716, %v719
        %v721 = vmul.f32 %v197, %v720
        %v722 = vadd.f32 %v192, %v721
        %v723 = vlaneseq
        %v724 = vshrl.u32 %v723, 7
        %v725 = vsub.s32 1, %v724
        %v726 = vrot.slane %v716, %v725
        %v727 = vmul.f32 %v207, %v726
        %v728 = vadd.f32 %v722, %v727
        %v729 = vlaneseq
        %v730 = vshrl.u32 %v729, 7
        %v731 = vsub.s32 2, %v730
        %v732 = vrot.slane %v716, %v731
        %v733 = vmul.f32 %v217, %v732
        %v734 = vadd.f32 %v728, %v733
        %v735 = vlaneseq
        %v736 = vshrl.u32 %v735, 7
        %v737 = vsub.s32 3, %v736
        %v738 = vrot.slane %v716, %v737
        %v739 = vmul.f32 %v227, %v738
        %v740 = vadd.f32 %v734, %v739
        %v741 = vtanh.pop %v740
        %v742 = vmul.f32 %v741, 0.125
        %v743 = vadd.f32 %v662, %v742
        %v744 = vlaneseq
        %v745 = vshrl.u32 %v744, 7
        %v746 = vsub.s32 0, %v745
        %v747 = vrot.slane %v743, %v746
        %v748 = vmul.f32 %v197, %v747
        %v749 = vadd.f32 %v192, %v748
        %v750 = vlaneseq
        %v751 = vshrl.u32 %v750, 7
        %v752 = vsub.s32 1, %v751
        %v753 = vrot.slane %v743, %v752
        %v754 = vmul.f32 %v207, %v753
        %v755 = vadd.f32 %v749, %v754
        %v756 = vlaneseq
        %v757 = vshrl.u32 %v756, 7
        %v758 = vsub.s32 2, %v757
        %v759 = vrot.slane %v743, %v758
        %v760 = vmul.f32 %v217, %v759
        %v761 = vadd.f32 %v755, %v760
        %v762 = vlaneseq
        %v763 = vshrl.u32 %v762, 7
        %v764 = vsub.s32 3, %v763
        %v765 = vrot.slane %v743, %v764
        %v766 = vmul.f32 %v227, %v765
        %v767 = vadd.f32 %v761, %v766
        %v768 = vtanh.pop %v767
        %v769 = vmul.f32 %v714, 2.0
        %v770 = vadd.f32 %v687, %v769
        %v771 = vmul.f32 %v741, 2.0
        %v772 = vadd.f32 %v770, %v771
        %v773 = vadd.f32 %v772, %v768
        %v774 = vmul.f32 %v773, 0.020833334
        %v775 = vadd.f32 %v662, %v774
        %v776 = vlaneseq
        %v777 = vshrl.u32 %v776, 7
        %v778 = vsub.s32 0, %v777
        %v779 = vrot.slane %v775, %v778
        %v780 = vmul.f32 %v197, %v779
        %v781 = vadd.f32 %v192, %v780
        %v782 = vlaneseq
        %v783 = vshrl.u32 %v782, 7
        %v784 = vsub.s32 1, %v783
        %v785 = vrot.slane %v775, %v784
        %v786 = vmul.f32 %v207, %v785
        %v787 = vadd.f32 %v781, %v786
        %v788 = vlaneseq
        %v789 = vshrl.u32 %v788, 7
        %v790 = vsub.s32 2, %v789
        %v791 = vrot.slane %v775, %v790
        %v792 = vmul.f32 %v217, %v791
        %v793 = vadd.f32 %v787, %v792
        %v794 = vlaneseq
        %v795 = vshrl.u32 %v794, 7
        %v796 = vsub.s32 3, %v795
        %v797 = vrot.slane %v775, %v796
        %v798 = vmul.f32 %v227, %v797
        %v799 = vadd.f32 %v793, %v798
        %v800 = vtanh.pop %v799
        %v801 = vmul.f32 %v800, 0.0625
        %v802 = vadd.f32 %v775, %v801
        %v803 = vlaneseq
        %v804 = vshrl.u32 %v803, 7
        %v805 = vsub.s32 0, %v804
        %v806 = vrot.slane %v802, %v805
        %v807 = vmul.f32 %v197, %v806
        %v808 = vadd.f32 %v192, %v807
        %v809 = vlaneseq
        %v810 = vshrl.u32 %v809, 7
        %v811 = vsub.s32 1, %v810
        %v812 = vrot.slane %v802, %v811
        %v813 = vmul.f32 %v207, %v812
        %v814 = vadd.f32 %v808, %v813
        %v815 = vlaneseq
        %v816 = vshrl.u32 %v815, 7
        %v817 = vsub.s32 2, %v816
        %v818 = vrot.slane %v802, %v817
        %v819 = vmul.f32 %v217, %v818
        %v820 = vadd.f32 %v814, %v819
        %v821 = vlaneseq
        %v822 = vshrl.u32 %v821, 7
        %v823 = vsub.s32 3, %v822
        %v824 = vrot.slane %v802, %v823
        %v825 = vmul.f32 %v227, %v824
        %v826 = vadd.f32 %v820, %v825
        %v827 = vtanh.pop %v826
        %v828 = vmul.f32 %v827, 0.0625
        %v829 = vadd.f32 %v775, %v828
        %v830 = vlaneseq
        %v831 = vshrl.u32 %v830, 7
        %v832 = vsub.s32 0, %v831
        %v833 = vrot.slane %v829, %v832
        %v834 = vmul.f32 %v197, %v833
        %v835 = vadd.f32 %v192, %v834
        %v836 = vlaneseq
        %v837 = vshrl.u32 %v836, 7
        %v838 = vsub.s32 1, %v837
        %v839 = vrot.slane %v829, %v838
        %v840 = vmul.f32 %v207, %v839
        %v841 = vadd.f32 %v835, %v840
        %v842 = vlaneseq
        %v843 = vshrl.u32 %v842, 7
        %v844 = vsub.s32 2, %v843
        %v845 = vrot.slane %v829, %v844
        %v846 = vmul.f32 %v217, %v845
        %v847 = vadd.f32 %v841, %v846
        %v848 = vlaneseq
        %v849 = vshrl.u32 %v848, 7
        %v850 = vsub.s32 3, %v849
        %v851 = vrot.slane %v829, %v850
        %v852 = vmul.f32 %v227, %v851
        %v853 = vadd.f32 %v847, %v852
        %v854 = vtanh.pop %v853
        %v855 = vmul.f32 %v854, 0.125
        %v856 = vadd.f32 %v775, %v855
        %v857 = vlaneseq
        %v858 = vshrl.u32 %v857, 7
        %v859 = vsub.s32 0, %v858
        %v860 = vrot.slane %v856, %v859
        %v861 = vmul.f32 %v197, %v860
        %v862 = vadd.f32 %v192, %v861
        %v863 = vlaneseq
        %v864 = vshrl.u32 %v863, 7
        %v865 = vsub.s32 1, %v864
        %v866 = vrot.slane %v856, %v865
        %v867 = vmul.f32 %v207, %v866
        %v868 = vadd.f32 %v862, %v867
        %v869 = vlaneseq
        %v870 = vshrl.u32 %v869, 7
        %v871 = vsub.s32 2, %v870
        %v872 = vrot.slane %v856, %v871
        %v873 = vmul.f32 %v217, %v872
        %v874 = vadd.f32 %v868, %v873
        %v875 = vlaneseq
        %v876 = vshrl.u32 %v875, 7
        %v877 = vsub.s32 3, %v876
        %v878 = vrot.slane %v856, %v877
        %v879 = vmul.f32 %v227, %v878
        %v880 = vadd.f32 %v874, %v879
        %v881 = vtanh.pop %v880
        %v882 = vmul.f32 %v827, 2.0
        %v883 = vadd.f32 %v800, %v882
        %v884 = vmul.f32 %v854, 2.0
        %v885 = vadd.f32 %v883, %v884
        %v886 = vadd.f32 %v885, %v881
        %v887 = vmul.f32 %v886, 0.020833334
        %v888 = vadd.f32 %v775, %v887
        %v889 = vlaneseq
        %v890 = vshrl.u32 %v889, 7
        %v891 = vsub.s32 0, %v890
        %v892 = vrot.slane %v888, %v891
        %v893 = vmul.f32 %v197, %v892
        %v894 = vadd.f32 %v192, %v893
        %v895 = vlaneseq
        %v896 = vshrl.u32 %v895, 7
        %v897 = vsub.s32 1, %v896
        %v898 = vrot.slane %v888, %v897
        %v899 = vmul.f32 %v207, %v898
        %v900 = vadd.f32 %v894, %v899
        %v901 = vlaneseq
        %v902 = vshrl.u32 %v901, 7
        %v903 = vsub.s32 2, %v902
        %v904 = vrot.slane %v888, %v903
        %v905 = vmul.f32 %v217, %v904
        %v906 = vadd.f32 %v900, %v905
        %v907 = vlaneseq
        %v908 = vshrl.u32 %v907, 7
        %v909 = vsub.s32 3, %v908
        %v910 = vrot.slane %v888, %v909
        %v911 = vmul.f32 %v227, %v910
        %v912 = vadd.f32 %v906, %v911
        %v913 = vtanh.pop %v912
        %v914 = vmul.f32 %v913, 0.0625
        %v915 = vadd.f32 %v888, %v914
        %v916 = vlaneseq
        %v917 = vshrl.u32 %v916, 7
        %v918 = vsub.s32 0, %v917
        %v919 = vrot.slane %v915, %v918
        %v920 = vmul.f32 %v197, %v919
        %v921 = vadd.f32 %v192, %v920
        %v922 = vlaneseq
        %v923 = vshrl.u32 %v922, 7
        %v924 = vsub.s32 1, %v923
        %v925 = vrot.slane %v915, %v924
        %v926 = vmul.f32 %v207, %v925
        %v927 = vadd.f32 %v921, %v926
        %v928 = vlaneseq
        %v929 = vshrl.u32 %v928, 7
        %v930 = vsub.s32 2, %v929
        %v931 = vrot.slane %v915, %v930
        %v932 = vmul.f32 %v217, %v931
        %v933 = vadd.f32 %v927, %v932
        %v934 = vlaneseq
        %v935 = vshrl.u32 %v934, 7
        %v936 = vsub.s32 3, %v935
        %v937 = vrot.slane %v915, %v936
        %v938 = vmul.f32 %v227, %v937
        %v939 = vadd.f32 %v933, %v938
        %v940 = vtanh.pop %v939
        %v941 = vmul.f32 %v940, 0.0625
        %v942 = vadd.f32 %v888, %v941
        %v943 = vlaneseq
        %v944 = vshrl.u32 %v943, 7
        %v945 = vsub.s32 0, %v944
        %v946 = vrot.slane %v942, %v945
        %v947 = vmul.f32 %v197, %v946
        %v948 = vadd.f32 %v192, %v947
        %v949 = vlaneseq
        %v950 = vshrl.u32 %v949, 7
        %v951 = vsub.s32 1, %v950
        %v952 = vrot.slane %v942, %v951
        %v953 = vmul.f32 %v207, %v952
        %v954 = vadd.f32 %v948, %v953
        %v955 = vlaneseq
        %v956 = vshrl.u32 %v955, 7
        %v957 = vsub.s32 2, %v956
        %v958 = vrot.slane %v942, %v957
        %v959 = vmul.f32 %v217, %v958
        %v960 = vadd.f32 %v954, %v959
        %v961 = vlaneseq
        %v962 = vshrl.u32 %v961, 7
        %v963 = vsub.s32 3, %v962
        %v964 = vrot.slane %v942, %v963
        %v965 = vmul.f32 %v227, %v964
        %v966 = vadd.f32 %v960, %v965
        %v967 = vtanh.pop %v966
        %v968 = vmul.f32 %v967, 0.125
        %v969 = vadd.f32 %v888, %v968
        %v970 = vlaneseq
        %v971 = vshrl.u32 %v970, 7
        %v972 = vsub.s32 0, %v971
        %v973 = vrot.slane %v969, %v972
        %v974 = vmul.f32 %v197, %v973
        %v975 = vadd.f32 %v192, %v974
        %v976 = vlaneseq
        %v977 = vshrl.u32 %v976, 7
        %v978 = vsub.s32 1, %v977
        %v979 = vrot.slane %v969, %v978
        %v980 = vmul.f32 %v207, %v979
        %v981 = vadd.f32 %v975, %v980
        %v982 = vlaneseq
        %v983 = vshrl.u32 %v982, 7
        %v984 = vsub.s32 2, %v983
        %v985 = vrot.slane %v969, %v984
        %v986 = vmul.f32 %v217, %v985
        %v987 = vadd.f32 %v981, %v986
        %v988 = vlaneseq
        %v989 = vshrl.u32 %v988, 7
        %v990 = vsub.s32 3, %v989
        %v991 = vrot.slane %v969, %v990
        %v992 = vmul.f32 %v227, %v991
        %v993 = vadd.f32 %v987, %v992
        %v994 = vtanh.pop %v993
        %v995 = vmul.f32 %v940, 2.0
        %v996 = vadd.f32 %v913, %v995
        %v997 = vmul.f32 %v967, 2.0
        %v998 = vadd.f32 %v996, %v997
        %v999 = vadd.f32 %v998, %v994
        %v1000 = vmul.f32 %v999, 0.020833334
        %v1001 = vadd.f32 %v888, %v1000
        %v1002 = vlaneseq
        %v1003 = vshrl.u32 %v1002, 7
        %v1004 = vsub.s32 0, %v1003
        %v1005 = vrot.slane %v1001, %v1004
        %v1006 = vmul.f32 %v197, %v1005
        %v1007 = vadd.f32 %v192, %v1006
        %v1008 = vlaneseq
        %v1009 = vshrl.u32 %v1008, 7
        %v1010 = vsub.s32 1, %v1009
        %v1011 = vrot.slane %v1001, %v1010
        %v1012 = vmul.f32 %v207, %v1011
        %v1013 = vadd.f32 %v1007, %v1012
        %v1014 = vlaneseq
        %v1015 = vshrl.u32 %v1014, 7
        %v1016 = vsub.s32 2, %v1015
        %v1017 = vrot.slane %v1001, %v1016
        %v1018 = vmul.f32 %v217, %v1017
        %v1019 = vadd.f32 %v1013, %v1018
        %v1020 = vlaneseq
        %v1021 = vshrl.u32 %v1020, 7
        %v1022 = vsub.s32 3, %v1021
        %v1023 = vrot.slane %v1001, %v1022
        %v1024 = vmul.f32 %v227, %v1023
        %v1025 = vadd.f32 %v1019, %v1024
        %v1026 = vtanh.pop %v1025
        %v1027 = vmul.f32 %v1026, 0.0625
        %v1028 = vadd.f32 %v1001, %v1027
        %v1029 = vlaneseq
        %v1030 = vshrl.u32 %v1029, 7
        %v1031 = vsub.s32 0, %v1030
        %v1032 = vrot.slane %v1028, %v1031
        %v1033 = vmul.f32 %v197, %v1032
        %v1034 = vadd.f32 %v192, %v1033
        %v1035 = vlaneseq
        %v1036 = vshrl.u32 %v1035, 7
        %v1037 = vsub.s32 1, %v1036
        %v1038 = vrot.slane %v1028, %v1037
        %v1039 = vmul.f32 %v207, %v1038
        %v1040 = vadd.f32 %v1034, %v1039
        %v1041 = vlaneseq
        %v1042 = vshrl.u32 %v1041, 7
        %v1043 = vsub.s32 2, %v1042
        %v1044 = vrot.slane %v1028, %v1043
        %v1045 = vmul.f32 %v217, %v1044
        %v1046 = vadd.f32 %v1040, %v1045
        %v1047 = vlaneseq
        %v1048 = vshrl.u32 %v1047, 7
        %v1049 = vsub.s32 3, %v1048
        %v1050 = vrot.slane %v1028, %v1049
        %v1051 = vmul.f32 %v227, %v1050
        %v1052 = vadd.f32 %v1046, %v1051
        %v1053 = vtanh.pop %v1052
        %v1054 = vmul.f32 %v1053, 0.0625
        %v1055 = vadd.f32 %v1001, %v1054
        %v1056 = vlaneseq
        %v1057 = vshrl.u32 %v1056, 7
        %v1058 = vsub.s32 0, %v1057
        %v1059 = vrot.slane %v1055, %v1058
        %v1060 = vmul.f32 %v197, %v1059
        %v1061 = vadd.f32 %v192, %v1060
        %v1062 = vlaneseq
        %v1063 = vshrl.u32 %v1062, 7
        %v1064 = vsub.s32 1, %v1063
        %v1065 = vrot.slane %v1055, %v1064
        %v1066 = vmul.f32 %v207, %v1065
        %v1067 = vadd.f32 %v1061, %v1066
        %v1068 = vlaneseq
        %v1069 = vshrl.u32 %v1068, 7
        %v1070 = vsub.s32 2, %v1069
        %v1071 = vrot.slane %v1055, %v1070
        %v1072 = vmul.f32 %v217, %v1071
        %v1073 = vadd.f32 %v1067, %v1072
        %v1074 = vlaneseq
        %v1075 = vshrl.u32 %v1074, 7
        %v1076 = vsub.s32 3, %v1075
        %v1077 = vrot.slane %v1055, %v1076
        %v1078 = vmul.f32 %v227, %v1077
        %v1079 = vadd.f32 %v1073, %v1078
        %v1080 = vtanh.pop %v1079
        %v1081 = vmul.f32 %v1080, 0.125
        %v1082 = vadd.f32 %v1001, %v1081
        %v1083 = vlaneseq
        %v1084 = vshrl.u32 %v1083, 7
        %v1085 = vsub.s32 0, %v1084
        %v1086 = vrot.slane %v1082, %v1085
        %v1087 = vmul.f32 %v197, %v1086
        %v1088 = vadd.f32 %v192, %v1087
        %v1089 = vlaneseq
        %v1090 = vshrl.u32 %v1089, 7
        %v1091 = vsub.s32 1, %v1090
        %v1092 = vrot.slane %v1082, %v1091
        %v1093 = vmul.f32 %v207, %v1092
        %v1094 = vadd.f32 %v1088, %v1093
        %v1095 = vlaneseq
        %v1096 = vshrl.u32 %v1095, 7
        %v1097 = vsub.s32 2, %v1096
        %v1098 = vrot.slane %v1082, %v1097
        %v1099 = vmul.f32 %v217, %v1098
        %v1100 = vadd.f32 %v1094, %v1099
        %v1101 = vlaneseq
        %v1102 = vshrl.u32 %v1101, 7
        %v1103 = vsub.s32 3, %v1102
        %v1104 = vrot.slane %v1082, %v1103
        %v1105 = vmul.f32 %v227, %v1104
        %v1106 = vadd.f32 %v1100, %v1105
        %v1107 = vtanh.pop %v1106
        %v1108 = vmul.f32 %v1053, 2.0
        %v1109 = vadd.f32 %v1026, %v1108
        %v1110 = vmul.f32 %v1080, 2.0
        %v1111 = vadd.f32 %v1109, %v1110
        %v1112 = vadd.f32 %v1111, %v1107
        %v1113 = vmul.f32 %v1112, 0.020833334
        %v1114 = vadd.f32 %v1001, %v1113
        %1115 = vst [vmem:[%s185] sm:$0xf] %v1114
        %s1116 = sand.u32 %s96, 1
        %s1117 = scalar_lea.sflag [#allocation4], %s1116
        %s1118 = sand.u32 %s96, 1
        %s1119 = smul.addr %s1118, 4
        %s1120 = scalar_lea.vmem [#allocation5], %s1119
        // Predicated region
        $region37: #{tpu_custom_call.1} parent=31 // pred_check
          %p1121 = pneg %p106
        $region38: #{tpu_custom_call.1} parent=31 // pred_check_branch
          %1123 = sbr.rel (%p1121) target = $region40
        $region39: #{tpu_custom_call.1} parent=31 // pred_region
          %s1125 = ssub.s32 64, 64
          %1126 = vsyncadd %s1117, %s1125
          %s1127 = smul.addr %s20, 64
          %s1128 = scalar_lea.hbm %s3, %s1127
          %s1130 = sshll.u32 %s1120, 4
          %s1131 = int_to_ptr.vmem [resolvable:$true] %s1130
          %1133 = dma.vmem_to_hbm [thread:$0]  %s1131, 64, %s1128, %s1117
        $region40: #{tpu_custom_call.1} parent=31 // pred_fallthru
          _
      $region32: #{tpu_custom_call.1} parent=5 // pred_fallthru
        _
      %p1134 = scmp.le.s32.totalorder 2, %s15
      // Predicated region
      $region41: #{tpu_custom_call.1} parent=5 // pred_check
        %p1135 = pneg %p1134
      $region42: #{tpu_custom_call.1} parent=5 // pred_check_branch
        %1137 = sbr.rel (%p1135) target = $region44
      $region43: #{tpu_custom_call.1} parent=5 // pred_region
        %s1138 = ssub.s32 %s15, 2
        // Predicated region
        $region45: #{tpu_custom_call.1} parent=43 // pred_check
          %p1139 = pneg %p112
        $region46: #{tpu_custom_call.1} parent=43 // pred_check_branch
          %1141 = sbr.rel (%p1139) target = $region48
        $region47: #{tpu_custom_call.1} parent=43 // pred_region
          %s1142 = sand.u32 %s97, 1
          %s1143 = scalar_lea.sflag [#allocation4], %s1142
          %s1144 = sand.u32 %s97, 1
          %s1145 = smul.addr %s1144, 4
          %s1146 = scalar_lea.vmem [#allocation5], %s1145
          %1147 = dma.done %s1143, 64
        $region48: #{tpu_custom_call.1} parent=43 // pred_fallthru
          _
      $region44: #{tpu_custom_call.1} parent=5 // pred_fallthru
        _
    $region6: #{tpu_custom_call.1} parent=1 // loop_footer
      %s19 = sadd.s32 1, %s15
    $region7: #{tpu_custom_call.1} parent=1 // loop_footer_branch
      %14 = sbr.rel target = $region3
    $region8: #{tpu_custom_call.1} parent=1 // loop_exit
      _
    %1148 = vsyncpa [#allocation3], 1
    %s1149 = scalar_lea.sflag [#allocation3], 1
    %1150 = vsyncpa %s1149, 1
    %1151 = vsyncpa [#allocation4], 1
    %s1152 = scalar_lea.sflag [#allocation4], 1
    %1153 = vsyncpa %s1152, 1

</llo_original>
